<compile_context>
chip_gen: v5e
topology: v5e:2x2
jax: 0.10.0
libtpu: 0.0.40
codegen_flags: <defaults>
</compile_context>

<pallas_src>
import numpy as np
import jax
import jax.numpy as jnp
from jax import lax
from jax.experimental import pallas as pl
from jax.experimental.pallas import tpu as pltpu

H_IN, W_IN, C_IN = 12, 12, 3
IN_LANES = H_IN * W_IN * C_IN        # 432, lanes ordered (h, w, c)
C1, C2, C3 = 10, 16, 32
QUAD_LANES = 256                      # 25 pooled cells * 10 ch = 250 -> pad to 256
CONV1_LANES = 4 * QUAD_LANES          # 1024 (4 pool quadrants)
CONV2_LANES = 9 * C2                  # 144 (3x3 spatial x 16 ch)
HEAD_LANES = 8                        # [cls0, cls1, box0..3, pad, pad]


def _round_up(x, m):
    return (x + m - 1) // m * m


# ----------------------------------------------------------------------------- kernel

def pnet_kernel(alpha_ref, x_ref, w1_ref, b1_ref, w2_ref, b2_ref,
                w3_ref, b3_ref, wh_ref, bh_ref, out_ref):
    # PReLU slopes as SMEM scalars.
    a1 = alpha_ref[0]
    a2 = alpha_ref[1]
    a3 = alpha_ref[2]

    def prelu(v, a):
        return jnp.where(v > 0, v, a * v)

    x = x_ref[...]                                            # (B, 432) bf16

    # conv1 (3x3, 3->10) fused over (ky,kx,cin) and every output pixel: one
    # (B,432)@(432,1024) dot; output lanes ordered (quadrant, pooled-cell, c_out).
    y1 = jnp.dot(x, w1_ref[...], preferred_element_type=jnp.float32) + b1_ref[...]
    y1 = prelu(y1, a1)                                        # (B, 1024) f32

    # 2x2/2 maxpool == 3 elementwise maxima over 128-aligned 256-lane slabs.
    pooled = jnp.maximum(
        jnp.maximum(y1[:, 0:256], y1[:, 256:512]),
        jnp.maximum(y1[:, 512:768], y1[:, 768:1024]))         # (B, 256) lanes (cell, c)
    pooled = pooled.astype(jnp.bfloat16)

    # conv2 (3x3, 10->16): all 9 output pixels in one (B,256)@(256,144) dot.
    y2 = prelu(jnp.dot(pooled, w2_ref[...],
                       preferred_element_type=jnp.float32) + b2_ref[...], a2)

    # conv3 (3x3, 16->32): single output pixel, one (B,144)@(144,32) dot.
    y3 = prelu(jnp.dot(y2.astype(jnp.bfloat16), w3_ref[...],
                       preferred_element_type=jnp.float32) + b3_ref[...], a3)

    # Fused 1x1 heads: (B,32)@(32,8) -> [cls logits | box | 2 zero pad lanes].
    z = jnp.dot(y3.astype(jnp.bfloat16), wh_ref[...],
                preferred_element_type=jnp.float32) + bh_ref[...]      # (B, 8) f32

    # 2-class Softmax2d == sigmoid of the logit difference (exact, no XLU reduce).
    d = z[:, 1:2] - z[:, 0:1]
    p1 = 1.0 / (1.0 + jnp.exp(-d))
    p0 = 1.0 - p1
    # Lanes 6:8 of z are exactly zero by construction (zero weight/bias columns).
    out_ref[...] = jnp.concatenate([p0, p1, z[:, 2:8]], axis=-1)


# ----------------------------------------------------------------------------- host-side weight packing (numpy, done once)

def _pack_conv1(w1, b1):
    """(432,1024) fused conv1 weight; columns (quadrant, pooled cell, c_out)."""
    w = np.zeros((IN_LANES, CONV1_LANES), np.float32)
    b = np.zeros((CONV1_LANES,), np.float32)
    for dh in range(2):
        for dw in range(2):
            q = 2 * dh + dw
            for i in range(5):
                for j in range(5):
                    h1, w1p = 2 * i + dh, 2 * j + dw
                    base = q * QUAD_LANES + (i * 5 + j) * C1
                    for co in range(C1):
                        col = base + co
                        b[col] = b1[co]
                        for ky in range(3):
                            for kx in range(3):
                                for ci in range(C_IN):
                                    row = ((h1 + ky) * W_IN + (w1p + kx)) * C_IN + ci
                                    w[row, col] = w1[co, ci, ky, kx]
    return w, b


def _pack_conv2(w2, b2):
    """(256,144) fused conv2 weight; rows (pooled cell, c_in), cols (pixel, c_out)."""
    w = np.zeros((QUAD_LANES, CONV2_LANES), np.float32)
    b = np.zeros((CONV2_LANES,), np.float32)
    for h2 in range(3):
        for w2p in range(3):
            for co in range(C2):
                col = (h2 * 3 + w2p) * C2 + co
                b[col] = b2[co]
                for ky in range(3):
                    for kx in range(3):
                        for ci in range(C1):
                            row = ((h2 + ky) * 5 + (w2p + kx)) * C1 + ci
                            w[row, col] = w2[co, ci, ky, kx]
    return w, b


def _pack_conv3(w3):
    """(144,32) fused conv3 weight; rows (pixel, c_in)."""
    w = np.zeros((CONV2_LANES, C3), np.float32)
    for co in range(C3):
        for ky in range(3):
            for kx in range(3):
                for ci in range(C2):
                    row = (ky * 3 + kx) * C2 + ci
                    w[row, co] = w3[co, ci, ky, kx]
    return w


def _pack_head(wc2, bc2, wc4, bc4):
    """(32,8) fused head weight: cols [cls0, cls1, box0..3, pad, pad]."""
    w = np.zeros((C3, HEAD_LANES), np.float32)
    b = np.zeros((HEAD_LANES,), np.float32)
    w[:, 0:2] = wc2.reshape(2, C3).T
    w[:, 2:6] = wc4.reshape(4, C3).T
    b[0:2] = bc2
    b[2:6] = bc4
    return w, b


def pack_params(params):
    """One-time host-side packing of the fused/banded weights (call once, reuse)."""
    w1f, b1f = _pack_conv1(np.asarray(params["w1"], np.float32),
                           np.asarray(params["b1"], np.float32))
    w2f, b2f = _pack_conv2(np.asarray(params["w2"], np.float32),
                           np.asarray(params["b2"], np.float32))
    w3f = _pack_conv3(np.asarray(params["w3"], np.float32))
    wh, bh = _pack_head(np.asarray(params["wc2"], np.float32),
                        np.asarray(params["bc2"], np.float32),
                        np.asarray(params["wc4"], np.float32),
                        np.asarray(params["bc4"], np.float32))
    return dict(
        w1f=jnp.asarray(w1f, jnp.bfloat16),
        b1f=jnp.asarray(b1f.reshape(1, -1), jnp.float32),
        w2f=jnp.asarray(w2f, jnp.bfloat16),
        b2f=jnp.asarray(b2f.reshape(1, -1), jnp.float32),
        w3f=jnp.asarray(w3f, jnp.bfloat16),
        b3f=jnp.asarray(np.asarray(params["b3"], np.float32).reshape(1, -1), jnp.float32),
        wh=jnp.asarray(wh, jnp.bfloat16),
        bh=jnp.asarray(bh.reshape(1, -1), jnp.float32),
        alphas=jnp.asarray(np.stack([np.float32(params["a1"]),
                                     np.float32(params["a2"]),
                                     np.float32(params["a3"])]), jnp.float32),
    )


# ----------------------------------------------------------------------------- forward

def pnet_forward(x_nchw, packed, *, batch_tile=1024):
    """x_nchw: (N, 3, 12, 12) float32. Returns (cls (N,2,1,1), box (N,4,1,1))."""
    n = x_nchw.shape[0]
    block_b = min(_round_up(batch_tile, 8), _round_up(n, 8))
    n_pad = _round_up(n, block_b)
    grid = (n_pad // block_b,)

    # Lane-dense, bf16 input: one (432,) row per image, lanes ordered (h, w, c).
    x = jnp.transpose(x_nchw, (0, 2, 3, 1)).reshape(n, IN_LANES).astype(jnp.bfloat16)
    if n_pad != n:
        x = jnp.pad(x, ((0, n_pad - n), (0, 0)))

    def rep2(arr):
        return pl.BlockSpec(arr.shape, lambda i: (0, 0))

    in_specs = [
        pl.BlockSpec(memory_space=pltpu.MemorySpace.SMEM),            # alphas (3,)
        pl.BlockSpec((block_b, IN_LANES), lambda i: (i, 0)),          # x tile
        rep2(packed["w1f"]), rep2(packed["b1f"]),
        rep2(packed["w2f"]), rep2(packed["b2f"]),
        rep2(packed["w3f"]), rep2(packed["b3f"]),
        rep2(packed["wh"]), rep2(packed["bh"]),
    ]
    out_specs = pl.BlockSpec((block_b, HEAD_LANES), lambda i: (i, 0))
    out_shape = jax.ShapeDtypeStruct((n_pad, HEAD_LANES), jnp.float32)

    out = pl.pallas_call(
        pnet_kernel,
        grid=grid,
        in_specs=in_specs,
        out_specs=out_specs,
        out_shape=out_shape,
        compiler_params=pltpu.CompilerParams(
            dimension_semantics=("parallel",),
            vmem_limit_bytes=32 * 1024 * 1024),
    )(packed["alphas"], x, packed["w1f"], packed["b1f"], packed["w2f"],
      packed["b2f"], packed["w3f"], packed["b3f"], packed["wh"], packed["bh"])

    cls = out[:n, 0:2].reshape(n, 1, 1, 2).transpose(0, 3, 1, 2)   # (N, 2, 1, 1)
    box = out[:n, 2:6].reshape(n, 1, 1, 4).transpose(0, 3, 1, 2)   # (N, 4, 1, 1)
    return cls, box


# ----------------------------------------------------------------------------- params + reference

def init_params(key):
    ks = jax.random.split(key, 10)

    def conv_w(k, cout, cin, kh, kw, scale=0.1):
        return scale * jax.random.normal(k, (cout, cin, kh, kw), jnp.float32)

    return dict(
        w1=conv_w(ks[0], 10, 3, 3, 3),
        b1=0.1 * jax.random.normal(ks[1], (10,), jnp.float32),
        w2=conv_w(ks[2], 16, 10, 3, 3),
        b2=0.1 * jax.random.normal(ks[3], (16,), jnp.float32),
        w3=conv_w(ks[4], 32, 16, 3, 3),
        b3=0.1 * jax.random.normal(ks[5], (32,), jnp.float32),
        wc2=conv_w(ks[6], 2, 32, 1, 1),
        bc2=0.1 * jax.random.normal(ks[7], (2,), jnp.float32),
        wc4=conv_w(ks[8], 4, 32, 1, 1),
        bc4=0.1 * jax.random.normal(ks[9], (4,), jnp.float32),
        a1=jnp.float32(0.25),   # nn.PReLU() default (single shared slope)
        a2=jnp.float32(0.25),
        a3=jnp.float32(0.25),
    )


def pnet_reference(x_nchw, params):
    """Pure-JAX (XLA, f32) reference matching the PyTorch module semantics."""
    def conv(x, w, b):
        y = lax.conv_general_dilated(x, w, window_strides=(1, 1), padding="VALID",
                                     dimension_numbers=("NCHW", "OIHW", "NCHW"))
        return y + b.reshape(1, -1, 1, 1)

    def prelu(y, a):
        return jnp.where(y > 0, y, a * y)

    y = prelu(conv(x_nchw, params["w1"], params["b1"]), params["a1"])
    y = lax.reduce_window(y, -jnp.inf, lax.max, (1, 1, 2, 2), (1, 1, 2, 2), "VALID")
    y = prelu(conv(y, params["w2"], params["b2"]), params["a2"])
    y = prelu(conv(y, params["w3"], params["b3"]), params["a3"])
    cls = jax.nn.softmax(conv(y, params["wc2"], params["bc2"]), axis=1)
    box = conv(y, params["wc4"], params["bc4"])
    return cls, box


if __name__ == "__main__":
    key = jax.random.PRNGKey(0)
    kx, kp = jax.random.split(key)
    x = jax.random.normal(kx, (2, 3, 12, 12), jnp.float32)   # PyTorch NCHW input
    params = init_params(kp)
    packed = pack_params(params)                             # host-side, once

    fwd = jax.jit(pnet_forward, static_argnames=("batch_tile",))
    cls, box = fwd(x, packed)
    jax.block_until_ready((cls, box))

    assert cls.shape == (2, 2, 1, 1) and box.shape == (2, 4, 1, 1)

    cls_ref, box_ref = pnet_reference(x, params)
    # bf16 inputs/weights (f32 accumulation) vs. exact f32 reference -> ~1e-2 level
    # relative error expected; tolerances relaxed accordingly.
    np.testing.assert_allclose(np.asarray(box), np.asarray(box_ref),
                               rtol=5e-2, atol=3e-2)
    np.testing.assert_allclose(np.asarray(cls), np.asarray(cls_ref),
                               rtol=5e-2, atol=2e-2)

    print("KERNEL_OK")
</pallas_src>

<mosaic_0001>
module attributes {stable_mosaic.version = 11 : i64} {
  func.func @pnet_kernel(%arg0: i32, %arg1: memref<3xf32, #tpu.memory_space<smem>>, %arg2: memref<8x432xbf16, #tpu.memory_space<vmem>>, %arg3: memref<432x1024xbf16, #tpu.memory_space<vmem>>, %arg4: memref<1x1024xf32, #tpu.memory_space<vmem>>, %arg5: memref<256x144xbf16, #tpu.memory_space<vmem>>, %arg6: memref<1x144xf32, #tpu.memory_space<vmem>>, %arg7: memref<144x32xbf16, #tpu.memory_space<vmem>>, %arg8: memref<1x32xf32, #tpu.memory_space<vmem>>, %arg9: memref<32x8xbf16, #tpu.memory_space<vmem>>, %arg10: memref<1x8xf32, #tpu.memory_space<vmem>>, %arg11: memref<8x8xf32, #tpu.memory_space<vmem>>) attributes {dimension_semantics = [#tpu.dimension_semantics<parallel>], iteration_bounds = array<i64: 1>, scalar_prefetch = 0 : i64, scratch_operands = 0 : i64, tpu.core_type = #tpu.core_type<tc>, window_params = [{transform_indices = @transform_0, window_bounds = array<i64: 3>}, {transform_indices = @transform_1, window_bounds = array<i64: 8, 432>}, {pipeline_mode = #tpu.pipeline_mode<synchronous>, transform_indices = @transform_2, window_bounds = array<i64: 432, 1024>}, {pipeline_mode = #tpu.pipeline_mode<synchronous>, transform_indices = @transform_3, window_bounds = array<i64: 1, 1024>}, {pipeline_mode = #tpu.pipeline_mode<synchronous>, transform_indices = @transform_4, window_bounds = array<i64: 256, 144>}, {pipeline_mode = #tpu.pipeline_mode<synchronous>, transform_indices = @transform_5, window_bounds = array<i64: 1, 144>}, {pipeline_mode = #tpu.pipeline_mode<synchronous>, transform_indices = @transform_6, window_bounds = array<i64: 144, 32>}, {pipeline_mode = #tpu.pipeline_mode<synchronous>, transform_indices = @transform_7, window_bounds = array<i64: 1, 32>}, {pipeline_mode = #tpu.pipeline_mode<synchronous>, transform_indices = @transform_8, window_bounds = array<i64: 32, 8>}, {pipeline_mode = #tpu.pipeline_mode<synchronous>, transform_indices = @transform_9, window_bounds = array<i64: 1, 8>}, {transform_indices = @transform_10, window_bounds = array<i64: 8, 8>}]} {
    %c0 = arith.constant 0 : index
    %0 = memref.load %arg1[%c0] : memref<3xf32, #tpu.memory_space<smem>>
    %c1 = arith.constant 1 : index
    %1 = memref.load %arg1[%c1] : memref<3xf32, #tpu.memory_space<smem>>
    %c2 = arith.constant 2 : index
    %2 = memref.load %arg1[%c2] : memref<3xf32, #tpu.memory_space<smem>>
    %c0_0 = arith.constant 0 : index
    %c0_1 = arith.constant 0 : index
    %3 = vector.load %arg2[%c0_0, %c0_1] : memref<8x432xbf16, #tpu.memory_space<vmem>>, vector<8x432xbf16>
    %c0_2 = arith.constant 0 : index
    %c0_3 = arith.constant 0 : index
    %4 = vector.load %arg3[%c0_2, %c0_3] : memref<432x1024xbf16, #tpu.memory_space<vmem>>, vector<432x1024xbf16>
    %cst = arith.constant dense<0.000000e+00> : vector<8x1024xf32>
    %5 = tpu.matmul %3, %4, %cst {dimension_numbers = #tpu.dot_dimension_numbers<[1], [0], [0], [1], [0, 0, 1, 1], [], []>} : vector<8x432xbf16>, vector<432x1024xbf16>, vector<8x1024xf32> -> vector<8x1024xf32>
    %c0_4 = arith.constant 0 : index
    %c0_5 = arith.constant 0 : index
    %6 = vector.load %arg4[%c0_4, %c0_5] : memref<1x1024xf32, #tpu.memory_space<vmem>>, vector<1x1024xf32>
    %7 = vector.broadcast %6 : vector<1x1024xf32> to vector<8x1024xf32>
    %8 = arith.addf %5, %7 : vector<8x1024xf32>
    %cst_6 = arith.constant 0.000000e+00 : f32
    %9 = vector.broadcast %cst_6 : f32 to vector<8x1024xf32>
    %10 = arith.cmpf ogt, %8, %9 : vector<8x1024xf32>
    %11 = vector.broadcast %0 : f32 to vector<8x1024xf32>
    %12 = arith.mulf %11, %8 : vector<8x1024xf32>
    %13 = arith.select %10, %8, %12 : vector<8x1024xi1>, vector<8x1024xf32>
    %14 = vector.extract_strided_slice %13 {offsets = [0, 0], sizes = [8, 256], strides = [1, 1]} : vector<8x1024xf32> to vector<8x256xf32>
    %15 = vector.extract_strided_slice %13 {offsets = [0, 256], sizes = [8, 256], strides = [1, 1]} : vector<8x1024xf32> to vector<8x256xf32>
    %16 = arith.maximumf %14, %15 : vector<8x256xf32>
    %17 = vector.extract_strided_slice %13 {offsets = [0, 512], sizes = [8, 256], strides = [1, 1]} : vector<8x1024xf32> to vector<8x256xf32>
    %18 = vector.extract_strided_slice %13 {offsets = [0, 768], sizes = [8, 256], strides = [1, 1]} : vector<8x1024xf32> to vector<8x256xf32>
    %19 = arith.maximumf %17, %18 : vector<8x256xf32>
    %20 = arith.maximumf %16, %19 : vector<8x256xf32>
    %21 = arith.truncf %20 : vector<8x256xf32> to vector<8x256xbf16>
    %c0_7 = arith.constant 0 : index
    %c0_8 = arith.constant 0 : index
    %22 = vector.load %arg5[%c0_7, %c0_8] : memref<256x144xbf16, #tpu.memory_space<vmem>>, vector<256x144xbf16>
    %cst_9 = arith.constant dense<0.000000e+00> : vector<8x144xf32>
    %23 = tpu.matmul %21, %22, %cst_9 {dimension_numbers = #tpu.dot_dimension_numbers<[1], [0], [0], [1], [0, 0, 1, 1], [], []>} : vector<8x256xbf16>, vector<256x144xbf16>, vector<8x144xf32> -> vector<8x144xf32>
    %c0_10 = arith.constant 0 : index
    %c0_11 = arith.constant 0 : index
    %24 = vector.load %arg6[%c0_10, %c0_11] : memref<1x144xf32, #tpu.memory_space<vmem>>, vector<1x144xf32>
    %25 = vector.broadcast %24 : vector<1x144xf32> to vector<8x144xf32>
    %26 = arith.addf %23, %25 : vector<8x144xf32>
    %cst_12 = arith.constant 0.000000e+00 : f32
    %27 = vector.broadcast %cst_12 : f32 to vector<8x144xf32>
    %28 = arith.cmpf ogt, %26, %27 : vector<8x144xf32>
    %29 = vector.broadcast %1 : f32 to vector<8x144xf32>
    %30 = arith.mulf %29, %26 : vector<8x144xf32>
    %31 = arith.select %28, %26, %30 : vector<8x144xi1>, vector<8x144xf32>
    %32 = arith.truncf %31 : vector<8x144xf32> to vector<8x144xbf16>
    %c0_13 = arith.constant 0 : index
    %c0_14 = arith.constant 0 : index
    %33 = vector.load %arg7[%c0_13, %c0_14] : memref<144x32xbf16, #tpu.memory_space<vmem>>, vector<144x32xbf16>
    %cst_15 = arith.constant dense<0.000000e+00> : vector<8x32xf32>
    %34 = tpu.matmul %32, %33, %cst_15 {dimension_numbers = #tpu.dot_dimension_numbers<[1], [0], [0], [1], [0, 0, 1, 1], [], []>} : vector<8x144xbf16>, vector<144x32xbf16>, vector<8x32xf32> -> vector<8x32xf32>
    %c0_16 = arith.constant 0 : index
    %c0_17 = arith.constant 0 : index
    %35 = vector.load %arg8[%c0_16, %c0_17] : memref<1x32xf32, #tpu.memory_space<vmem>>, vector<1x32xf32>
    %36 = vector.broadcast %35 : vector<1x32xf32> to vector<8x32xf32>
    %37 = arith.addf %34, %36 : vector<8x32xf32>
    %cst_18 = arith.constant 0.000000e+00 : f32
    %38 = vector.broadcast %cst_18 : f32 to vector<8x32xf32>
    %39 = arith.cmpf ogt, %37, %38 : vector<8x32xf32>
    %40 = vector.broadcast %2 : f32 to vector<8x32xf32>
    %41 = arith.mulf %40, %37 : vector<8x32xf32>
    %42 = arith.select %39, %37, %41 : vector<8x32xi1>, vector<8x32xf32>
    %43 = arith.truncf %42 : vector<8x32xf32> to vector<8x32xbf16>
    %c0_19 = arith.constant 0 : index
    %c0_20 = arith.constant 0 : index
    %44 = vector.load %arg9[%c0_19, %c0_20] : memref<32x8xbf16, #tpu.memory_space<vmem>>, vector<32x8xbf16>
    %cst_21 = arith.constant dense<0.000000e+00> : vector<8x8xf32>
    %45 = tpu.matmul %43, %44, %cst_21 {dimension_numbers = #tpu.dot_dimension_numbers<[1], [0], [0], [1], [0, 0, 1, 1], [], []>} : vector<8x32xbf16>, vector<32x8xbf16>, vector<8x8xf32> -> vector<8x8xf32>
    %c0_22 = arith.constant 0 : index
    %c0_23 = arith.constant 0 : index
    %46 = vector.load %arg10[%c0_22, %c0_23] : memref<1x8xf32, #tpu.memory_space<vmem>>, vector<1x8xf32>
    %47 = vector.broadcast %46 : vector<1x8xf32> to vector<8x8xf32>
    %48 = arith.addf %45, %47 : vector<8x8xf32>
    %49 = vector.extract_strided_slice %48 {offsets = [0, 1], sizes = [8, 1], strides = [1, 1]} : vector<8x8xf32> to vector<8x1xf32>
    %50 = vector.extract_strided_slice %48 {offsets = [0, 0], sizes = [8, 1], strides = [1, 1]} : vector<8x8xf32> to vector<8x1xf32>
    %51 = arith.subf %49, %50 : vector<8x1xf32>
    %cst_24 = arith.constant 0.000000e+00 : f32
    %52 = vector.broadcast %cst_24 : f32 to vector<8x1xf32>
    %53 = arith.subf %52, %51 : vector<8x1xf32>
    %54 = math.exp %53 : vector<8x1xf32>
    %cst_25 = arith.constant 1.000000e+00 : f32
    %55 = vector.broadcast %cst_25 : f32 to vector<8x1xf32>
    %56 = arith.addf %55, %54 : vector<8x1xf32>
    %cst_26 = arith.constant 1.000000e+00 : f32
    %57 = vector.broadcast %cst_26 : f32 to vector<8x1xf32>
    %58 = arith.divf %57, %56 : vector<8x1xf32>
    %cst_27 = arith.constant 1.000000e+00 : f32
    %59 = vector.broadcast %cst_27 : f32 to vector<8x1xf32>
    %60 = arith.subf %59, %58 : vector<8x1xf32>
    %61 = vector.extract_strided_slice %48 {offsets = [0, 2], sizes = [8, 6], strides = [1, 1]} : vector<8x8xf32> to vector<8x6xf32>
    %62 = tpu.concatenate %60, %58, %61 in 1 : vector<8x1xf32>, vector<8x1xf32>, vector<8x6xf32> -> vector<8x8xf32>
    %c0_28 = arith.constant 0 : index
    %c0_29 = arith.constant 0 : index
    %63 = vector.load %arg11[%c0_28, %c0_29] : memref<8x8xf32, #tpu.memory_space<vmem>>, vector<8x8xf32>
    tpu.vector_store %arg11[%c0_28, %c0_29], %62 {strides = array<i32>} : memref<8x8xf32, #tpu.memory_space<vmem>>, vector<8x8xf32>,
    return
  }
  func.func @transform_0(%arg0: i32) -> i32 {
    %c0_i32 = arith.constant 0 : i32
    %c0_i32_0 = arith.constant 0 : i32
    return %c0_i32 : i32
  }
  func.func @transform_1(%arg0: i32) -> (i32, i32) {
    %c0_i32 = arith.constant 0 : i32
    %c0_i32_0 = arith.constant 0 : i32
    return %arg0, %c0_i32 : i32, i32
  }
  func.func @transform_2(%arg0: i32) -> (i32, i32) {
    %c0_i32 = arith.constant 0 : i32
    %c0_i32_0 = arith.constant 0 : i32
    %c0_i32_1 = arith.constant 0 : i32
    return %c0_i32, %c0_i32_0 : i32, i32
  }
  func.func @transform_3(%arg0: i32) -> (i32, i32) {
    %c0_i32 = arith.constant 0 : i32
    %c0_i32_0 = arith.constant 0 : i32
    %c0_i32_1 = arith.constant 0 : i32
    return %c0_i32, %c0_i32_0 : i32, i32
  }
  func.func @transform_4(%arg0: i32) -> (i32, i32) {
    %c0_i32 = arith.constant 0 : i32
    %c0_i32_0 = arith.constant 0 : i32
    %c0_i32_1 = arith.constant 0 : i32
    return %c0_i32, %c0_i32_0 : i32, i32
  }
  func.func @transform_5(%arg0: i32) -> (i32, i32) {
    %c0_i32 = arith.constant 0 : i32
    %c0_i32_0 = arith.constant 0 : i32
    %c0_i32_1 = arith.constant 0 : i32
    return %c0_i32, %c0_i32_0 : i32, i32
  }
  func.func @transform_6(%arg0: i32) -> (i32, i32) {
    %c0_i32 = arith.constant 0 : i32
    %c0_i32_0 = arith.constant 0 : i32
    %c0_i32_1 = arith.constant 0 : i32
    return %c0_i32, %c0_i32_0 : i32, i32
  }
  func.func @transform_7(%arg0: i32) -> (i32, i32) {
    %c0_i32 = arith.constant 0 : i32
    %c0_i32_0 = arith.constant 0 : i32
    %c0_i32_1 = arith.constant 0 : i32
    return %c0_i32, %c0_i32_0 : i32, i32
  }
  func.func @transform_8(%arg0: i32) -> (i32, i32) {
    %c0_i32 = arith.constant 0 : i32
    %c0_i32_0 = arith.constant 0 : i32
    %c0_i32_1 = arith.constant 0 : i32
    return %c0_i32, %c0_i32_0 : i32, i32
  }
  func.func @transform_9(%arg0: i32) -> (i32, i32) {
    %c0_i32 = arith.constant 0 : i32
    %c0_i32_0 = arith.constant 0 : i32
    %c0_i32_1 = arith.constant 0 : i32
    return %c0_i32, %c0_i32_0 : i32, i32
  }
  func.func @transform_10(%arg0: i32) -> (i32, i32) {
    %c0_i32 = arith.constant 0 : i32
    %c0_i32_0 = arith.constant 0 : i32
    return %arg0, %c0_i32 : i32, i32
  }
}

</mosaic_0001>

<llo_original>
// kernel: pnet_forward.1
$region0: #{pnet_forward.1}
  #allocation0 [shape = 'u32[]', space=smem, size = 0x4, offset = 0x4, fixed_abs, tag = 'smem constant byte address 0x4 - core index']
  #allocation1 [shape = 'u32[72,128]{1,0:T(1,128)}', space=vmem, size = 0x9000, scoped, tag = 'internal scratch']
  %s0 = inlined_call_operand.vmem [shape: f32[3], index: 0, kind: input, shape index: {}]
  %s1 = inlined_call_operand.vmem [shape: bf16[8,432], index: 1, kind: input, shape index: {}]
  %s2 = inlined_call_operand.hbm [shape: bf16[432,1024], index: 2, kind: input, shape index: {}]
  %s3 = inlined_call_operand.vmem [shape: f32[1,1024], index: 3, kind: input, shape index: {}]
  %s4 = inlined_call_operand.vmem [shape: bf16[256,144], index: 4, kind: input, shape index: {}]
  %s5 = inlined_call_operand.vmem [shape: f32[1,144], index: 5, kind: input, shape index: {}]
  %s6 = inlined_call_operand.vmem [shape: bf16[144,32], index: 6, kind: input, shape index: {}]
  %s7 = inlined_call_operand.vmem [shape: f32[1,32], index: 7, kind: input, shape index: {}]
  %s8 = inlined_call_operand.vmem [shape: bf16[32,8], index: 8, kind: input, shape index: {}]
  %s9 = inlined_call_operand.vmem [shape: f32[1,8], index: 9, kind: input, shape index: {}]
  %s10 = inlined_call_operand.vmem [shape: f32[8,8], index: 10, kind: output, shape index: {}]
  %s11 = sld [smem:[#allocation0]]
  $region58: #{pnet_forward.1} parent=0
    _
  %s13 = ssub.s32 1, %s11
  %s14 = scalar_select 0, %s13, %s11
  $region1: #{pnet_forward.1} parent=0
    #allocation2 [shape = 'u8[512]{0}', space=smem, size = 0x200, scoped, tag = 'input window, operand 0, single buffered']
    #allocation3 [shape = 's32[1]{0}', space=sflag, size = 0x4, scoped, tag = 'scoped memory for pnet_forward.1']
    #allocation4 [shape = 's32[1]{0}', space=sflag, size = 0x4, scoped, tag = 'scoped memory for pnet_forward.1']
    #allocation5 [shape = 'u8[884736]{0}', space=vmem, size = 0xd8000, scoped, tag = 'input window, operand 2, single buffered']
    %15 = vsyncpa [#allocation4], 0
    %16 = vsyncpa [#allocation3], 0
    // Predicated region
    $region2: #{pnet_forward.1} parent=1 // pred_check
      _
    $region3: #{pnet_forward.1} parent=1 // pred_check_branch
      %18 = sbr.rel (0) target = $region5
    $region4: #{pnet_forward.1} parent=1 // pred_region
      %20 = vsyncadd [#allocation4], 0
      %s22 = sshll.u32 %s0, 4
      %s23 = int_to_ptr.vmem [resolvable:$true] %s22
      %25 = dma.vmem_to_smem %s23, 16, [#allocation2], [#allocation4]
    $region5: #{pnet_forward.1} parent=1 // pred_fallthru
      _
    // Predicated region
    $region6: #{pnet_forward.1} parent=1 // pred_check
      _
    $region7: #{pnet_forward.1} parent=1 // pred_check_branch
      %27 = sbr.rel (0) target = $region9
    $region8: #{pnet_forward.1} parent=1 // pred_region
      _
    $region9: #{pnet_forward.1} parent=1 // pred_fallthru
      _
    // Predicated region
    $region10: #{pnet_forward.1} parent=1 // pred_check
      _
    $region11: #{pnet_forward.1} parent=1 // pred_check_branch
      %29 = sbr.rel (0) target = $region13
    $region12: #{pnet_forward.1} parent=1 // pred_region
      %31 = vsyncadd [#allocation3], 0
      %s32 = sshll.u32 %s2, 4
      %s33 = int_to_ptr.hbm [resolvable:$true] %s32
      %s34 = sshll.u32 [#allocation5], 4
      %s35 = int_to_ptr.vmem [resolvable:$true] %s34
      %40 = dma.hbm_to_vmem [thread:$0]  %s33, 27648, %s35, [#allocation3], 512, 512, 32
    $region13: #{pnet_forward.1} parent=1 // pred_fallthru
      _
    // Predicated region
    $region14: #{pnet_forward.1} parent=1 // pred_check
      _
    $region15: #{pnet_forward.1} parent=1 // pred_check_branch
      %42 = sbr.rel (0) target = $region17
    $region16: #{pnet_forward.1} parent=1 // pred_region
      _
    $region17: #{pnet_forward.1} parent=1 // pred_fallthru
      _
    // Predicated region
    $region18: #{pnet_forward.1} parent=1 // pred_check
      _
    $region19: #{pnet_forward.1} parent=1 // pred_check_branch
      %44 = sbr.rel (0) target = $region21
    $region20: #{pnet_forward.1} parent=1 // pred_region
      _
    $region21: #{pnet_forward.1} parent=1 // pred_fallthru
      _
    // Predicated region
    $region22: #{pnet_forward.1} parent=1 // pred_check
      _
    $region23: #{pnet_forward.1} parent=1 // pred_check_branch
      %46 = sbr.rel (0) target = $region25
    $region24: #{pnet_forward.1} parent=1 // pred_region
      _
    $region25: #{pnet_forward.1} parent=1 // pred_fallthru
      _
    // Predicated region
    $region26: #{pnet_forward.1} parent=1 // pred_check
      _
    $region27: #{pnet_forward.1} parent=1 // pred_check_branch
      %48 = sbr.rel (0) target = $region29
    $region28: #{pnet_forward.1} parent=1 // pred_region
      _
    $region29: #{pnet_forward.1} parent=1 // pred_fallthru
      _
    // Predicated region
    $region30: #{pnet_forward.1} parent=1 // pred_check
      _
    $region31: #{pnet_forward.1} parent=1 // pred_check_branch
      %50 = sbr.rel (0) target = $region33
    $region32: #{pnet_forward.1} parent=1 // pred_region
      _
    $region33: #{pnet_forward.1} parent=1 // pred_fallthru
      _
    // Predicated region
    $region34: #{pnet_forward.1} parent=1 // pred_check
      _
    $region35: #{pnet_forward.1} parent=1 // pred_check_branch
      %52 = sbr.rel (0) target = $region37
    $region36: #{pnet_forward.1} parent=1 // pred_region
      _
    $region37: #{pnet_forward.1} parent=1 // pred_fallthru
      _
    // Predicated region
    $region38: #{pnet_forward.1} parent=1 // pred_check
      _
    $region39: #{pnet_forward.1} parent=1 // pred_check_branch
      %54 = sbr.rel (0) target = $region41
    $region40: #{pnet_forward.1} parent=1 // pred_region
      _
    $region41: #{pnet_forward.1} parent=1 // pred_fallthru
      _
    // Predicated region
    $region42: #{pnet_forward.1} parent=1 // pred_check
      _
    $region43: #{pnet_forward.1} parent=1 // pred_check_branch
      %56 = sbr.rel (0) target = $region45
    $region44: #{pnet_forward.1} parent=1 // pred_region
      %58 = dma.done [#allocation4], 16
    $region45: #{pnet_forward.1} parent=1 // pred_fallthru
      _
    // Predicated region
    $region46: #{pnet_forward.1} parent=1 // pred_check
      _
    $region47: #{pnet_forward.1} parent=1 // pred_check_branch
      %60 = sbr.rel (0) target = $region49
    $region48: #{pnet_forward.1} parent=1 // pred_region
      %62 = dma.done [#allocation3], 27648
    $region49: #{pnet_forward.1} parent=1 // pred_fallthru
      _
    %63 = sfence
    %s65 = sld [smem:[#allocation2]]
    %s66 = sld [smem:[#allocation2 + $0x1]]
    %s67 = sld [smem:[#allocation2 + $0x2]]
    %v68 = vld [vmem:[%s1] sm:$0xff]
    %v69 = vld [vmem:[%s1 + $0x8] sm:$0xff]
    %v70 = vld [vmem:[#allocation5] sm:$0xff]
    %v71 = vld [vmem:[#allocation5 + $0x8] sm:$0xff]
    %v72 = vld [vmem:[#allocation5 + $0x10] sm:$0xff]
    %v73 = vld [vmem:[#allocation5 + $0x18] sm:$0xff]
    %v74 = vld [vmem:[#allocation5 + $0x20] sm:$0xff]
    %v75 = vld [vmem:[#allocation5 + $0x28] sm:$0xff]
    %v76 = vld [vmem:[#allocation5 + $0x30] sm:$0xff]
    %v77 = vld [vmem:[#allocation5 + $0x38] sm:$0xff]
    %v78 = vld [vmem:[#allocation5 + $0x40] sm:$0xff]
    %v79 = vld [vmem:[#allocation5 + $0x48] sm:$0xff]
    %v80 = vld [vmem:[#allocation5 + $0x50] sm:$0xff]
    %v81 = vld [vmem:[#allocation5 + $0x58] sm:$0xff]
    %v82 = vld [vmem:[#allocation5 + $0x60] sm:$0xff]
    %v83 = vld [vmem:[#allocation5 + $0x68] sm:$0xff]
    %v84 = vld [vmem:[#allocation5 + $0x70] sm:$0xff]
    %v85 = vld [vmem:[#allocation5 + $0x78] sm:$0xff]
    %v86 = vld [vmem:[#allocation5 + $0x80] sm:$0xff]
    %v87 = vld [vmem:[#allocation5 + $0x88] sm:$0xff]
    %v88 = vld [vmem:[#allocation5 + $0x90] sm:$0xff]
    %v89 = vld [vmem:[#allocation5 + $0x98] sm:$0xff]
    %v90 = vld [vmem:[#allocation5 + $0xa0] sm:$0xff]
    %v91 = vld [vmem:[#allocation5 + $0xa8] sm:$0xff]
    %v92 = vld [vmem:[#allocation5 + $0xb0] sm:$0xff]
    %v93 = vld [vmem:[#allocation5 + $0xb8] sm:$0xff]
    %v94 = vld [vmem:[#allocation5 + $0xc0] sm:$0xff]
    %v95 = vld [vmem:[#allocation5 + $0xc8] sm:$0xff]
    %v96 = vld [vmem:[#allocation5 + $0xd0] sm:$0xff]
    %v97 = vld [vmem:[#allocation5 + $0xd8] sm:$0xff]
    %v98 = vld [vmem:[#allocation5 + $0xe0] sm:$0xff]
    %v99 = vld [vmem:[#allocation5 + $0xe8] sm:$0xff]
    %v100 = vld [vmem:[#allocation5 + $0xf0] sm:$0xff]
    %v101 = vld [vmem:[#allocation5 + $0xf8] sm:$0xff]
    %v102 = vld [vmem:[#allocation5 + $0x100] sm:$0xff]
    %v103 = vld [vmem:[#allocation5 + $0x108] sm:$0xff]
    %v104 = vld [vmem:[#allocation5 + $0x110] sm:$0xff]
    %v105 = vld [vmem:[#allocation5 + $0x118] sm:$0xff]
    %v106 = vld [vmem:[#allocation5 + $0x120] sm:$0xff]
    %v107 = vld [vmem:[#allocation5 + $0x128] sm:$0xff]
    %v108 = vld [vmem:[#allocation5 + $0x130] sm:$0xff]
    %v109 = vld [vmem:[#allocation5 + $0x138] sm:$0xff]
    %v110 = vld [vmem:[#allocation5 + $0x140] sm:$0xff]
    %v111 = vld [vmem:[#allocation5 + $0x148] sm:$0xff]
    %v112 = vld [vmem:[#allocation5 + $0x150] sm:$0xff]
    %v113 = vld [vmem:[#allocation5 + $0x158] sm:$0xff]
    %v114 = vld [vmem:[#allocation5 + $0x160] sm:$0xff]
    %v115 = vld [vmem:[#allocation5 + $0x168] sm:$0xff]
    %v116 = vld [vmem:[#allocation5 + $0x170] sm:$0xff]
    %v117 = vld [vmem:[#allocation5 + $0x178] sm:$0xff]
    %v118 = vld [vmem:[#allocation5 + $0x180] sm:$0xff]
    %v119 = vld [vmem:[#allocation5 + $0x188] sm:$0xff]
    %v120 = vld [vmem:[#allocation5 + $0x190] sm:$0xff]
    %v121 = vld [vmem:[#allocation5 + $0x198] sm:$0xff]
    %v122 = vld [vmem:[#allocation5 + $0x1a0] sm:$0xff]
    %v123 = vld [vmem:[#allocation5 + $0x1a8] sm:$0xff]
    %v124 = vld [vmem:[#allocation5 + $0x1b0] sm:$0xff]
    %v125 = vld [vmem:[#allocation5 + $0x1b8] sm:$0xff]
    %v126 = vld [vmem:[#allocation5 + $0x1c0] sm:$0xff]
    %v127 = vld [vmem:[#allocation5 + $0x1c8] sm:$0xff]
    %v128 = vld [vmem:[#allocation5 + $0x1d0] sm:$0xff]
    %v129 = vld [vmem:[#allocation5 + $0x1d8] sm:$0xff]
    %v130 = vld [vmem:[#allocation5 + $0x1e0] sm:$0xff]
    %v131 = vld [vmem:[#allocation5 + $0x1e8] sm:$0xff]
    %v132 = vld [vmem:[#allocation5 + $0x1f0] sm:$0xff]
    %v133 = vld [vmem:[#allocation5 + $0x1f8] sm:$0xff]
    %v134 = vld [vmem:[#allocation5 + $0x200] sm:$0xff]
    %v135 = vld [vmem:[#allocation5 + $0x208] sm:$0xff]
    %v136 = vld [vmem:[#allocation5 + $0x210] sm:$0xff]
    %v137 = vld [vmem:[#allocation5 + $0x218] sm:$0xff]
    %v138 = vld [vmem:[#allocation5 + $0x220] sm:$0xff]
    %v139 = vld [vmem:[#allocation5 + $0x228] sm:$0xff]
    %v140 = vld [vmem:[#allocation5 + $0x230] sm:$0xff]
    %v141 = vld [vmem:[#allocation5 + $0x238] sm:$0xff]
    %v142 = vld [vmem:[#allocation5 + $0x240] sm:$0xff]
    %v143 = vld [vmem:[#allocation5 + $0x248] sm:$0xff]
    %v144 = vld [vmem:[#allocation5 + $0x250] sm:$0xff]
    %v145 = vld [vmem:[#allocation5 + $0x258] sm:$0xff]
    %v146 = vld [vmem:[#allocation5 + $0x260] sm:$0xff]
    %v147 = vld [vmem:[#allocation5 + $0x268] sm:$0xff]
    %v148 = vld [vmem:[#allocation5 + $0x270] sm:$0xff]
    %v149 = vld [vmem:[#allocation5 + $0x278] sm:$0xff]
    %v150 = vld [vmem:[#allocation5 + $0x280] sm:$0xff]
    %v151 = vld [vmem:[#allocation5 + $0x288] sm:$0xff]
    %v152 = vld [vmem:[#allocation5 + $0x290] sm:$0xff]
    %v153 = vld [vmem:[#allocation5 + $0x298] sm:$0xff]
    %v154 = vld [vmem:[#allocation5 + $0x2a0] sm:$0xff]
    %v155 = vld [vmem:[#allocation5 + $0x2a8] sm:$0xff]
    %v156 = vld [vmem:[#allocation5 + $0x2b0] sm:$0xff]
    %v157 = vld [vmem:[#allocation5 + $0x2b8] sm:$0xff]
    %v158 = vld [vmem:[#allocation5 + $0x2c0] sm:$0xff]
    %v159 = vld [vmem:[#allocation5 + $0x2c8] sm:$0xff]
    %v160 = vld [vmem:[#allocation5 + $0x2d0] sm:$0xff]
    %v161 = vld [vmem:[#allocation5 + $0x2d8] sm:$0xff]
    %v162 = vld [vmem:[#allocation5 + $0x2e0] sm:$0xff]
    %v163 = vld [vmem:[#allocation5 + $0x2e8] sm:$0xff]
    %v164 = vld [vmem:[#allocation5 + $0x2f0] sm:$0xff]
    %v165 = vld [vmem:[#allocation5 + $0x2f8] sm:$0xff]
    %v166 = vld [vmem:[#allocation5 + $0x300] sm:$0xff]
    %v167 = vld [vmem:[#allocation5 + $0x308] sm:$0xff]
    %v168 = vld [vmem:[#allocation5 + $0x310] sm:$0xff]
    %v169 = vld [vmem:[#allocation5 + $0x318] sm:$0xff]
    %v170 = vld [vmem:[#allocation5 + $0x320] sm:$0xff]
    %v171 = vld [vmem:[#allocation5 + $0x328] sm:$0xff]
    %v172 = vld [vmem:[#allocation5 + $0x330] sm:$0xff]
    %v173 = vld [vmem:[#allocation5 + $0x338] sm:$0xff]
    %v174 = vld [vmem:[#allocation5 + $0x340] sm:$0xff]
    %v175 = vld [vmem:[#allocation5 + $0x348] sm:$0xff]
    %v176 = vld [vmem:[#allocation5 + $0x350] sm:$0xff]
    %v177 = vld [vmem:[#allocation5 + $0x358] sm:$0xff]
    %v178 = vld [vmem:[#allocation5 + $0x360] sm:$0xff]
    %v179 = vld [vmem:[#allocation5 + $0x368] sm:$0xff]
    %v180 = vld [vmem:[#allocation5 + $0x370] sm:$0xff]
    %v181 = vld [vmem:[#allocation5 + $0x378] sm:$0xff]
    %v182 = vld [vmem:[#allocation5 + $0x380] sm:$0xff]
    %v183 = vld [vmem:[#allocation5 + $0x388] sm:$0xff]
    %v184 = vld [vmem:[#allocation5 + $0x390] sm:$0xff]
    %v185 = vld [vmem:[#allocation5 + $0x398] sm:$0xff]
    %v186 = vld [vmem:[#allocation5 + $0x3a0] sm:$0xff]
    %v187 = vld [vmem:[#allocation5 + $0x3a8] sm:$0xff]
    %v188 = vld [vmem:[#allocation5 + $0x3b0] sm:$0xff]
    %v189 = vld [vmem:[#allocation5 + $0x3b8] sm:$0xff]
    %v190 = vld [vmem:[#allocation5 + $0x3c0] sm:$0xff]
    %v191 = vld [vmem:[#allocation5 + $0x3c8] sm:$0xff]
    %v192 = vld [vmem:[#allocation5 + $0x3d0] sm:$0xff]
    %v193 = vld [vmem:[#allocation5 + $0x3d8] sm:$0xff]
    %v194 = vld [vmem:[#allocation5 + $0x3e0] sm:$0xff]
    %v195 = vld [vmem:[#allocation5 + $0x3e8] sm:$0xff]
    %v196 = vld [vmem:[#allocation5 + $0x3f0] sm:$0xff]
    %v197 = vld [vmem:[#allocation5 + $0x3f8] sm:$0xff]
    %v198 = vld [vmem:[#allocation5 + $0x400] sm:$0xff]
    %v199 = vld [vmem:[#allocation5 + $0x408] sm:$0xff]
    %v200 = vld [vmem:[#allocation5 + $0x410] sm:$0xff]
    %v201 = vld [vmem:[#allocation5 + $0x418] sm:$0xff]
    %v202 = vld [vmem:[#allocation5 + $0x420] sm:$0xff]
    %v203 = vld [vmem:[#allocation5 + $0x428] sm:$0xff]
    %v204 = vld [vmem:[#allocation5 + $0x430] sm:$0xff]
    %v205 = vld [vmem:[#allocation5 + $0x438] sm:$0xff]
    %v206 = vld [vmem:[#allocation5 + $0x440] sm:$0xff]
    %v207 = vld [vmem:[#allocation5 + $0x448] sm:$0xff]
    %v208 = vld [vmem:[#allocation5 + $0x450] sm:$0xff]
    %v209 = vld [vmem:[#allocation5 + $0x458] sm:$0xff]
    %v210 = vld [vmem:[#allocation5 + $0x460] sm:$0xff]
    %v211 = vld [vmem:[#allocation5 + $0x468] sm:$0xff]
    %v212 = vld [vmem:[#allocation5 + $0x470] sm:$0xff]
    %v213 = vld [vmem:[#allocation5 + $0x478] sm:$0xff]
    %v214 = vld [vmem:[#allocation5 + $0x480] sm:$0xff]
    %v215 = vld [vmem:[#allocation5 + $0x488] sm:$0xff]
    %v216 = vld [vmem:[#allocation5 + $0x490] sm:$0xff]
    %v217 = vld [vmem:[#allocation5 + $0x498] sm:$0xff]
    %v218 = vld [vmem:[#allocation5 + $0x4a0] sm:$0xff]
    %v219 = vld [vmem:[#allocation5 + $0x4a8] sm:$0xff]
    %v220 = vld [vmem:[#allocation5 + $0x4b0] sm:$0xff]
    %v221 = vld [vmem:[#allocation5 + $0x4b8] sm:$0xff]
    %v222 = vld [vmem:[#allocation5 + $0x4c0] sm:$0xff]
    %v223 = vld [vmem:[#allocation5 + $0x4c8] sm:$0xff]
    %v224 = vld [vmem:[#allocation5 + $0x4d0] sm:$0xff]
    %v225 = vld [vmem:[#allocation5 + $0x4d8] sm:$0xff]
    %v226 = vld [vmem:[#allocation5 + $0x4e0] sm:$0xff]
    %v227 = vld [vmem:[#allocation5 + $0x4e8] sm:$0xff]
    %v228 = vld [vmem:[#allocation5 + $0x4f0] sm:$0xff]
    %v229 = vld [vmem:[#allocation5 + $0x4f8] sm:$0xff]
    %v230 = vld [vmem:[#allocation5 + $0x500] sm:$0xff]
    %v231 = vld [vmem:[#allocation5 + $0x508] sm:$0xff]
    %v232 = vld [vmem:[#allocation5 + $0x510] sm:$0xff]
    %v233 = vld [vmem:[#allocation5 + $0x518] sm:$0xff]
    %v234 = vld [vmem:[#allocation5 + $0x520] sm:$0xff]
    %v235 = vld [vmem:[#allocation5 + $0x528] sm:$0xff]
    %v236 = vld [vmem:[#allocation5 + $0x530] sm:$0xff]
    %v237 = vld [vmem:[#allocation5 + $0x538] sm:$0xff]
    %v238 = vld [vmem:[#allocation5 + $0x540] sm:$0xff]
    %v239 = vld [vmem:[#allocation5 + $0x548] sm:$0xff]
    %v240 = vld [vmem:[#allocation5 + $0x550] sm:$0xff]
    %v241 = vld [vmem:[#allocation5 + $0x558] sm:$0xff]
    %v242 = vld [vmem:[#allocation5 + $0x560] sm:$0xff]
    %v243 = vld [vmem:[#allocation5 + $0x568] sm:$0xff]
    %v244 = vld [vmem:[#allocation5 + $0x570] sm:$0xff]
    %v245 = vld [vmem:[#allocation5 + $0x578] sm:$0xff]
    %v246 = vld [vmem:[#allocation5 + $0x580] sm:$0xff]
    %v247 = vld [vmem:[#allocation5 + $0x588] sm:$0xff]
    %v248 = vld [vmem:[#allocation5 + $0x590] sm:$0xff]
    %v249 = vld [vmem:[#allocation5 + $0x598] sm:$0xff]
    %v250 = vld [vmem:[#allocation5 + $0x5a0] sm:$0xff]
    %v251 = vld [vmem:[#allocation5 + $0x5a8] sm:$0xff]
    %v252 = vld [vmem:[#allocation5 + $0x5b0] sm:$0xff]
    %v253 = vld [vmem:[#allocation5 + $0x5b8] sm:$0xff]
    %v254 = vld [vmem:[#allocation5 + $0x5c0] sm:$0xff]
    %v255 = vld [vmem:[#allocation5 + $0x5c8] sm:$0xff]
    %v256 = vld [vmem:[#allocation5 + $0x5d0] sm:$0xff]
    %v257 = vld [vmem:[#allocation5 + $0x5d8] sm:$0xff]
    %v258 = vld [vmem:[#allocation5 + $0x5e0] sm:$0xff]
    %v259 = vld [vmem:[#allocation5 + $0x5e8] sm:$0xff]
    %v260 = vld [vmem:[#allocation5 + $0x5f0] sm:$0xff]
    %v261 = vld [vmem:[#allocation5 + $0x5f8] sm:$0xff]
    %v262 = vld [vmem:[#allocation5 + $0x600] sm:$0xff]
    %v263 = vld [vmem:[#allocation5 + $0x608] sm:$0xff]
    %v264 = vld [vmem:[#allocation5 + $0x610] sm:$0xff]
    %v265 = vld [vmem:[#allocation5 + $0x618] sm:$0xff]
    %v266 = vld [vmem:[#allocation5 + $0x620] sm:$0xff]
    %v267 = vld [vmem:[#allocation5 + $0x628] sm:$0xff]
    %v268 = vld [vmem:[#allocation5 + $0x630] sm:$0xff]
    %v269 = vld [vmem:[#allocation5 + $0x638] sm:$0xff]
    %v270 = vld [vmem:[#allocation5 + $0x640] sm:$0xff]
    %v271 = vld [vmem:[#allocation5 + $0x648] sm:$0xff]
    %v272 = vld [vmem:[#allocation5 + $0x650] sm:$0xff]
    %v273 = vld [vmem:[#allocation5 + $0x658] sm:$0xff]
    %v274 = vld [vmem:[#allocation5 + $0x660] sm:$0xff]
    %v275 = vld [vmem:[#allocation5 + $0x668] sm:$0xff]
    %v276 = vld [vmem:[#allocation5 + $0x670] sm:$0xff]
    %v277 = vld [vmem:[#allocation5 + $0x678] sm:$0xff]
    %v278 = vld [vmem:[#allocation5 + $0x680] sm:$0xff]
    %v279 = vld [vmem:[#allocation5 + $0x688] sm:$0xff]
    %v280 = vld [vmem:[#allocation5 + $0x690] sm:$0xff]
    %v281 = vld [vmem:[#allocation5 + $0x698] sm:$0xff]
    %v282 = vld [vmem:[#allocation5 + $0x6a0] sm:$0xff]
    %v283 = vld [vmem:[#allocation5 + $0x6a8] sm:$0xff]
    %v284 = vld [vmem:[#allocation5 + $0x6b0] sm:$0xff]
    %v285 = vld [vmem:[#allocation5 + $0x6b8] sm:$0xff]
    %v286 = vld [vmem:[%s3] sm:$0xff]
    %v288 = vperm.slane %v286, 0
    %v289 = vperm.slane %v286, 1
    %v290 = vperm.slane %v286, 2
    %v291 = vperm.slane %v286, 3
    %v292 = vperm.slane %v286, 4
    %v293 = vperm.slane %v286, 5
    %v294 = vperm.slane %v286, 6
    %v295 = vperm.slane %v286, 7
    %v306 = vunpack.c.l.b16 %v68
    %v307 = vunpack.c.h.b16 %v68
    %v308 = vunpack.c.l.b16 %v69
    %v309 = vunpack.c.h.b16 %v69
    %v310 = vpack.c.b16 %v306, %v306
    %v311 = vpack.c.b16 %v307, %v307
    %v312 = vpack.c.b16 %v308, %v308
    %v313 = vpack.c.b16 %v309, %v309
    %v533 = vunpack.c.l.b16 %v70
    %v534 = vunpack.c.h.b16 %v70
    %v535 = vunpack.c.l.b16 %v71
    %v536 = vunpack.c.h.b16 %v71
    %v537 = vunpack.c.l.b16 %v72
    %v538 = vunpack.c.h.b16 %v72
    %v539 = vunpack.c.l.b16 %v73
    %v540 = vunpack.c.h.b16 %v73
    %v541 = vunpack.c.l.b16 %v74
    %v542 = vunpack.c.h.b16 %v74
    %v543 = vunpack.c.l.b16 %v75
    %v544 = vunpack.c.h.b16 %v75
    %v545 = vunpack.c.l.b16 %v76
    %v546 = vunpack.c.h.b16 %v76
    %v547 = vunpack.c.l.b16 %v77
    %v548 = vunpack.c.h.b16 %v77
    %v549 = vunpack.c.l.b16 %v78
    %v550 = vunpack.c.h.b16 %v78
    %v551 = vunpack.c.l.b16 %v79
    %v552 = vunpack.c.h.b16 %v79
    %v553 = vunpack.c.l.b16 %v80
    %v554 = vunpack.c.h.b16 %v80
    %v555 = vunpack.c.l.b16 %v81
    %v556 = vunpack.c.h.b16 %v81
    %v557 = vunpack.c.l.b16 %v82
    %v558 = vunpack.c.h.b16 %v82
    %v559 = vunpack.c.l.b16 %v83
    %v560 = vunpack.c.h.b16 %v83
    %v561 = vunpack.c.l.b16 %v84
    %v562 = vunpack.c.h.b16 %v84
    %v563 = vunpack.c.l.b16 %v85
    %v564 = vunpack.c.h.b16 %v85
    %v565 = vunpack.c.l.b16 %v86
    %v566 = vunpack.c.h.b16 %v86
    %v567 = vunpack.c.l.b16 %v87
    %v568 = vunpack.c.h.b16 %v87
    %v569 = vunpack.c.l.b16 %v88
    %v570 = vunpack.c.h.b16 %v88
    %v571 = vunpack.c.l.b16 %v89
    %v572 = vunpack.c.h.b16 %v89
    %v573 = vunpack.c.l.b16 %v90
    %v574 = vunpack.c.h.b16 %v90
    %v575 = vunpack.c.l.b16 %v91
    %v576 = vunpack.c.h.b16 %v91
    %v577 = vunpack.c.l.b16 %v92
    %v578 = vunpack.c.h.b16 %v92
    %v579 = vunpack.c.l.b16 %v93
    %v580 = vunpack.c.h.b16 %v93
    %v581 = vunpack.c.l.b16 %v94
    %v582 = vunpack.c.h.b16 %v94
    %v583 = vunpack.c.l.b16 %v95
    %v584 = vunpack.c.h.b16 %v95
    %v585 = vunpack.c.l.b16 %v96
    %v586 = vunpack.c.h.b16 %v96
    %v587 = vunpack.c.l.b16 %v97
    %v588 = vunpack.c.h.b16 %v97
    %v589 = vunpack.c.l.b16 %v98
    %v590 = vunpack.c.h.b16 %v98
    %v591 = vunpack.c.l.b16 %v99
    %v592 = vunpack.c.h.b16 %v99
    %v593 = vunpack.c.l.b16 %v100
    %v594 = vunpack.c.h.b16 %v100
    %v595 = vunpack.c.l.b16 %v101
    %v596 = vunpack.c.h.b16 %v101
    %v597 = vunpack.c.l.b16 %v102
    %v598 = vunpack.c.h.b16 %v102
    %v599 = vunpack.c.l.b16 %v103
    %v600 = vunpack.c.h.b16 %v103
    %v601 = vunpack.c.l.b16 %v104
    %v602 = vunpack.c.h.b16 %v104
    %v603 = vunpack.c.l.b16 %v105
    %v604 = vunpack.c.h.b16 %v105
    %v605 = vunpack.c.l.b16 %v106
    %v606 = vunpack.c.h.b16 %v106
    %v607 = vunpack.c.l.b16 %v107
    %v608 = vunpack.c.h.b16 %v107
    %v609 = vunpack.c.l.b16 %v108
    %v610 = vunpack.c.h.b16 %v108
    %v611 = vunpack.c.l.b16 %v109
    %v612 = vunpack.c.h.b16 %v109
    %v613 = vunpack.c.l.b16 %v110
    %v614 = vunpack.c.h.b16 %v110
    %v615 = vunpack.c.l.b16 %v111
    %v616 = vunpack.c.h.b16 %v111
    %v617 = vunpack.c.l.b16 %v112
    %v618 = vunpack.c.h.b16 %v112
    %v619 = vunpack.c.l.b16 %v113
    %v620 = vunpack.c.h.b16 %v113
    %v621 = vunpack.c.l.b16 %v114
    %v622 = vunpack.c.h.b16 %v114
    %v623 = vunpack.c.l.b16 %v115
    %v624 = vunpack.c.h.b16 %v115
    %v625 = vunpack.c.l.b16 %v116
    %v626 = vunpack.c.h.b16 %v116
    %v627 = vunpack.c.l.b16 %v117
    %v628 = vunpack.c.h.b16 %v117
    %v629 = vunpack.c.l.b16 %v118
    %v630 = vunpack.c.h.b16 %v118
    %v631 = vunpack.c.l.b16 %v119
    %v632 = vunpack.c.h.b16 %v119
    %v633 = vunpack.c.l.b16 %v120
    %v634 = vunpack.c.h.b16 %v120
    %v635 = vunpack.c.l.b16 %v121
    %v636 = vunpack.c.h.b16 %v121
    %v637 = vunpack.c.l.b16 %v122
    %v638 = vunpack.c.h.b16 %v122
    %v639 = vunpack.c.l.b16 %v123
    %v640 = vunpack.c.h.b16 %v123
    %v641 = vunpack.c.l.b16 %v124
    %v642 = vunpack.c.h.b16 %v124
    %v643 = vunpack.c.l.b16 %v125
    %v644 = vunpack.c.h.b16 %v125
    %v645 = vunpack.c.l.b16 %v126
    %v646 = vunpack.c.h.b16 %v126
    %v647 = vunpack.c.l.b16 %v127
    %v648 = vunpack.c.h.b16 %v127
    %v649 = vunpack.c.l.b16 %v128
    %v650 = vunpack.c.h.b16 %v128
    %v651 = vunpack.c.l.b16 %v129
    %v652 = vunpack.c.h.b16 %v129
    %v653 = vunpack.c.l.b16 %v130
    %v654 = vunpack.c.h.b16 %v130
    %v655 = vunpack.c.l.b16 %v131
    %v656 = vunpack.c.h.b16 %v131
    %v657 = vunpack.c.l.b16 %v132
    %v658 = vunpack.c.h.b16 %v132
    %v659 = vunpack.c.l.b16 %v133
    %v660 = vunpack.c.h.b16 %v133
    %v661 = vunpack.c.l.b16 %v134
    %v662 = vunpack.c.h.b16 %v134
    %v663 = vunpack.c.l.b16 %v135
    %v664 = vunpack.c.h.b16 %v135
    %v665 = vunpack.c.l.b16 %v136
    %v666 = vunpack.c.h.b16 %v136
    %v667 = vunpack.c.l.b16 %v137
    %v668 = vunpack.c.h.b16 %v137
    %v669 = vunpack.c.l.b16 %v138
    %v670 = vunpack.c.h.b16 %v138
    %v671 = vunpack.c.l.b16 %v139
    %v672 = vunpack.c.h.b16 %v139
    %v673 = vunpack.c.l.b16 %v140
    %v674 = vunpack.c.h.b16 %v140
    %v675 = vunpack.c.l.b16 %v141
    %v676 = vunpack.c.h.b16 %v141
    %v677 = vunpack.c.l.b16 %v142
    %v678 = vunpack.c.h.b16 %v142
    %v679 = vunpack.c.l.b16 %v143
    %v680 = vunpack.c.h.b16 %v143
    %v681 = vunpack.c.l.b16 %v144
    %v682 = vunpack.c.h.b16 %v144
    %v683 = vunpack.c.l.b16 %v145
    %v684 = vunpack.c.h.b16 %v145
    %v685 = vunpack.c.l.b16 %v146
    %v686 = vunpack.c.h.b16 %v146
    %v687 = vunpack.c.l.b16 %v147
    %v688 = vunpack.c.h.b16 %v147
    %v689 = vunpack.c.l.b16 %v148
    %v690 = vunpack.c.h.b16 %v148
    %v691 = vunpack.c.l.b16 %v149
    %v692 = vunpack.c.h.b16 %v149
    %v693 = vunpack.c.l.b16 %v150
    %v694 = vunpack.c.h.b16 %v150
    %v695 = vunpack.c.l.b16 %v151
    %v696 = vunpack.c.h.b16 %v151
    %v697 = vunpack.c.l.b16 %v152
    %v698 = vunpack.c.h.b16 %v152
    %v699 = vunpack.c.l.b16 %v153
    %v700 = vunpack.c.h.b16 %v153
    %v701 = vunpack.c.l.b16 %v154
    %v702 = vunpack.c.h.b16 %v154
    %v703 = vunpack.c.l.b16 %v155
    %v704 = vunpack.c.h.b16 %v155
    %v705 = vunpack.c.l.b16 %v156
    %v706 = vunpack.c.h.b16 %v156
    %v707 = vunpack.c.l.b16 %v157
    %v708 = vunpack.c.h.b16 %v157
    %v709 = vunpack.c.l.b16 %v158
    %v710 = vunpack.c.h.b16 %v158
    %v711 = vunpack.c.l.b16 %v159
    %v712 = vunpack.c.h.b16 %v159
    %v713 = vunpack.c.l.b16 %v160
    %v714 = vunpack.c.h.b16 %v160
    %v715 = vunpack.c.l.b16 %v161
    %v716 = vunpack.c.h.b16 %v161
    %v717 = vunpack.c.l.b16 %v162
    %v718 = vunpack.c.h.b16 %v162
    %v719 = vunpack.c.l.b16 %v163
    %v720 = vunpack.c.h.b16 %v163
    %v721 = vunpack.c.l.b16 %v164
    %v722 = vunpack.c.h.b16 %v164
    %v723 = vunpack.c.l.b16 %v165
    %v724 = vunpack.c.h.b16 %v165
    %v725 = vunpack.c.l.b16 %v166
    %v726 = vunpack.c.h.b16 %v166
    %v727 = vunpack.c.l.b16 %v167
    %v728 = vunpack.c.h.b16 %v167
    %v729 = vunpack.c.l.b16 %v168
    %v730 = vunpack.c.h.b16 %v168
    %v731 = vunpack.c.l.b16 %v169
    %v732 = vunpack.c.h.b16 %v169
    %v733 = vunpack.c.l.b16 %v170
    %v734 = vunpack.c.h.b16 %v170
    %v735 = vunpack.c.l.b16 %v171
    %v736 = vunpack.c.h.b16 %v171
    %v737 = vunpack.c.l.b16 %v172
    %v738 = vunpack.c.h.b16 %v172
    %v739 = vunpack.c.l.b16 %v173
    %v740 = vunpack.c.h.b16 %v173
    %v741 = vunpack.c.l.b16 %v174
    %v742 = vunpack.c.h.b16 %v174
    %v743 = vunpack.c.l.b16 %v175
    %v744 = vunpack.c.h.b16 %v175
    %v745 = vunpack.c.l.b16 %v176
    %v746 = vunpack.c.h.b16 %v176
    %v747 = vunpack.c.l.b16 %v177
    %v748 = vunpack.c.h.b16 %v177
    %v749 = vunpack.c.l.b16 %v178
    %v750 = vunpack.c.h.b16 %v178
    %v751 = vunpack.c.l.b16 %v179
    %v752 = vunpack.c.h.b16 %v179
    %v753 = vunpack.c.l.b16 %v180
    %v754 = vunpack.c.h.b16 %v180
    %v755 = vunpack.c.l.b16 %v181
    %v756 = vunpack.c.h.b16 %v181
    %v757 = vunpack.c.l.b16 %v182
    %v758 = vunpack.c.h.b16 %v182
    %v759 = vunpack.c.l.b16 %v183
    %v760 = vunpack.c.h.b16 %v183
    %v761 = vunpack.c.l.b16 %v184
    %v762 = vunpack.c.h.b16 %v184
    %v763 = vunpack.c.l.b16 %v185
    %v764 = vunpack.c.h.b16 %v185
    %v765 = vunpack.c.l.b16 %v186
    %v766 = vunpack.c.h.b16 %v186
    %v767 = vunpack.c.l.b16 %v187
    %v768 = vunpack.c.h.b16 %v187
    %v769 = vunpack.c.l.b16 %v188
    %v770 = vunpack.c.h.b16 %v188
    %v771 = vunpack.c.l.b16 %v189
    %v772 = vunpack.c.h.b16 %v189
    %v773 = vunpack.c.l.b16 %v190
    %v774 = vunpack.c.h.b16 %v190
    %v775 = vunpack.c.l.b16 %v191
    %v776 = vunpack.c.h.b16 %v191
    %v777 = vunpack.c.l.b16 %v192
    %v778 = vunpack.c.h.b16 %v192
    %v779 = vunpack.c.l.b16 %v193
    %v780 = vunpack.c.h.b16 %v193
    %v781 = vunpack.c.l.b16 %v194
    %v782 = vunpack.c.h.b16 %v194
    %v783 = vunpack.c.l.b16 %v195
    %v784 = vunpack.c.h.b16 %v195
    %v785 = vunpack.c.l.b16 %v196
    %v786 = vunpack.c.h.b16 %v196
    %v787 = vunpack.c.l.b16 %v197
    %v788 = vunpack.c.h.b16 %v197
    %v789 = vunpack.c.l.b16 %v198
    %v790 = vunpack.c.h.b16 %v198
    %v791 = vunpack.c.l.b16 %v199
    %v792 = vunpack.c.h.b16 %v199
    %v793 = vunpack.c.l.b16 %v200
    %v794 = vunpack.c.h.b16 %v200
    %v795 = vunpack.c.l.b16 %v201
    %v796 = vunpack.c.h.b16 %v201
    %v797 = vunpack.c.l.b16 %v202
    %v798 = vunpack.c.h.b16 %v202
    %v799 = vunpack.c.l.b16 %v203
    %v800 = vunpack.c.h.b16 %v203
    %v801 = vunpack.c.l.b16 %v204
    %v802 = vunpack.c.h.b16 %v204
    %v803 = vunpack.c.l.b16 %v205
    %v804 = vunpack.c.h.b16 %v205
    %v805 = vunpack.c.l.b16 %v206
    %v806 = vunpack.c.h.b16 %v206
    %v807 = vunpack.c.l.b16 %v207
    %v808 = vunpack.c.h.b16 %v207
    %v809 = vunpack.c.l.b16 %v208
    %v810 = vunpack.c.h.b16 %v208
    %v811 = vunpack.c.l.b16 %v209
    %v812 = vunpack.c.h.b16 %v209
    %v813 = vunpack.c.l.b16 %v210
    %v814 = vunpack.c.h.b16 %v210
    %v815 = vunpack.c.l.b16 %v211
    %v816 = vunpack.c.h.b16 %v211
    %v817 = vunpack.c.l.b16 %v212
    %v818 = vunpack.c.h.b16 %v212
    %v819 = vunpack.c.l.b16 %v213
    %v820 = vunpack.c.h.b16 %v213
    %v821 = vunpack.c.l.b16 %v214
    %v822 = vunpack.c.h.b16 %v214
    %v823 = vunpack.c.l.b16 %v215
    %v824 = vunpack.c.h.b16 %v215
    %v825 = vunpack.c.l.b16 %v216
    %v826 = vunpack.c.h.b16 %v216
    %v827 = vunpack.c.l.b16 %v217
    %v828 = vunpack.c.h.b16 %v217
    %v829 = vunpack.c.l.b16 %v218
    %v830 = vunpack.c.h.b16 %v218
    %v831 = vunpack.c.l.b16 %v219
    %v832 = vunpack.c.h.b16 %v219
    %v833 = vunpack.c.l.b16 %v220
    %v834 = vunpack.c.h.b16 %v220
    %v835 = vunpack.c.l.b16 %v221
    %v836 = vunpack.c.h.b16 %v221
    %v837 = vunpack.c.l.b16 %v222
    %v838 = vunpack.c.h.b16 %v222
    %v839 = vunpack.c.l.b16 %v223
    %v840 = vunpack.c.h.b16 %v223
    %v841 = vunpack.c.l.b16 %v224
    %v842 = vunpack.c.h.b16 %v224
    %v843 = vunpack.c.l.b16 %v225
    %v844 = vunpack.c.h.b16 %v225
    %v845 = vunpack.c.l.b16 %v226
    %v846 = vunpack.c.h.b16 %v226
    %v847 = vunpack.c.l.b16 %v227
    %v848 = vunpack.c.h.b16 %v227
    %v849 = vunpack.c.l.b16 %v228
    %v850 = vunpack.c.h.b16 %v228
    %v851 = vunpack.c.l.b16 %v229
    %v852 = vunpack.c.h.b16 %v229
    %v853 = vunpack.c.l.b16 %v230
    %v854 = vunpack.c.h.b16 %v230
    %v855 = vunpack.c.l.b16 %v231
    %v856 = vunpack.c.h.b16 %v231
    %v857 = vunpack.c.l.b16 %v232
    %v858 = vunpack.c.h.b16 %v232
    %v859 = vunpack.c.l.b16 %v233
    %v860 = vunpack.c.h.b16 %v233
    %v861 = vunpack.c.l.b16 %v234
    %v862 = vunpack.c.h.b16 %v234
    %v863 = vunpack.c.l.b16 %v235
    %v864 = vunpack.c.h.b16 %v235
    %v865 = vunpack.c.l.b16 %v236
    %v866 = vunpack.c.h.b16 %v236
    %v867 = vunpack.c.l.b16 %v237
    %v868 = vunpack.c.h.b16 %v237
    %v869 = vunpack.c.l.b16 %v238
    %v870 = vunpack.c.h.b16 %v238
    %v871 = vunpack.c.l.b16 %v239
    %v872 = vunpack.c.h.b16 %v239
    %v873 = vunpack.c.l.b16 %v240
    %v874 = vunpack.c.h.b16 %v240
    %v875 = vunpack.c.l.b16 %v241
    %v876 = vunpack.c.h.b16 %v241
    %v877 = vunpack.c.l.b16 %v242
    %v878 = vunpack.c.h.b16 %v242
    %v879 = vunpack.c.l.b16 %v243
    %v880 = vunpack.c.h.b16 %v243
    %v881 = vunpack.c.l.b16 %v244
    %v882 = vunpack.c.h.b16 %v244
    %v883 = vunpack.c.l.b16 %v245
    %v884 = vunpack.c.h.b16 %v245
    %v885 = vunpack.c.l.b16 %v246
    %v886 = vunpack.c.h.b16 %v246
    %v887 = vunpack.c.l.b16 %v247
    %v888 = vunpack.c.h.b16 %v247
    %v889 = vunpack.c.l.b16 %v248
    %v890 = vunpack.c.h.b16 %v248
    %v891 = vunpack.c.l.b16 %v249
    %v892 = vunpack.c.h.b16 %v249
    %v893 = vunpack.c.l.b16 %v250
    %v894 = vunpack.c.h.b16 %v250
    %v895 = vunpack.c.l.b16 %v251
    %v896 = vunpack.c.h.b16 %v251
    %v897 = vunpack.c.l.b16 %v252
    %v898 = vunpack.c.h.b16 %v252
    %v899 = vunpack.c.l.b16 %v253
    %v900 = vunpack.c.h.b16 %v253
    %v901 = vunpack.c.l.b16 %v254
    %v902 = vunpack.c.h.b16 %v254
    %v903 = vunpack.c.l.b16 %v255
    %v904 = vunpack.c.h.b16 %v255
    %v905 = vunpack.c.l.b16 %v256
    %v906 = vunpack.c.h.b16 %v256
    %v907 = vunpack.c.l.b16 %v257
    %v908 = vunpack.c.h.b16 %v257
    %v909 = vunpack.c.l.b16 %v258
    %v910 = vunpack.c.h.b16 %v258
    %v911 = vunpack.c.l.b16 %v259
    %v912 = vunpack.c.h.b16 %v259
    %v913 = vunpack.c.l.b16 %v260
    %v914 = vunpack.c.h.b16 %v260
    %v915 = vunpack.c.l.b16 %v261
    %v916 = vunpack.c.h.b16 %v261
    %v917 = vunpack.c.l.b16 %v262
    %v918 = vunpack.c.h.b16 %v262
    %v919 = vunpack.c.l.b16 %v263
    %v920 = vunpack.c.h.b16 %v263
    %v921 = vunpack.c.l.b16 %v264
    %v922 = vunpack.c.h.b16 %v264
    %v923 = vunpack.c.l.b16 %v265
    %v924 = vunpack.c.h.b16 %v265
    %v925 = vunpack.c.l.b16 %v266
    %v926 = vunpack.c.h.b16 %v266
    %v927 = vunpack.c.l.b16 %v267
    %v928 = vunpack.c.h.b16 %v267
    %v929 = vunpack.c.l.b16 %v268
    %v930 = vunpack.c.h.b16 %v268
    %v931 = vunpack.c.l.b16 %v269
    %v932 = vunpack.c.h.b16 %v269
    %v933 = vunpack.c.l.b16 %v270
    %v934 = vunpack.c.h.b16 %v270
    %v935 = vunpack.c.l.b16 %v271
    %v936 = vunpack.c.h.b16 %v271
    %v937 = vunpack.c.l.b16 %v272
    %v938 = vunpack.c.h.b16 %v272
    %v939 = vunpack.c.l.b16 %v273
    %v940 = vunpack.c.h.b16 %v273
    %v941 = vunpack.c.l.b16 %v274
    %v942 = vunpack.c.h.b16 %v274
    %v943 = vunpack.c.l.b16 %v275
    %v944 = vunpack.c.h.b16 %v275
    %v945 = vunpack.c.l.b16 %v276
    %v946 = vunpack.c.h.b16 %v276
    %v947 = vunpack.c.l.b16 %v277
    %v948 = vunpack.c.h.b16 %v277
    %v949 = vunpack.c.l.b16 %v278
    %v950 = vunpack.c.h.b16 %v278
    %v951 = vunpack.c.l.b16 %v279
    %v952 = vunpack.c.h.b16 %v279
    %v953 = vunpack.c.l.b16 %v280
    %v954 = vunpack.c.h.b16 %v280
    %v955 = vunpack.c.l.b16 %v281
    %v956 = vunpack.c.h.b16 %v281
    %v957 = vunpack.c.l.b16 %v282
    %v958 = vunpack.c.h.b16 %v282
    %v959 = vunpack.c.l.b16 %v283
    %v960 = vunpack.c.h.b16 %v283
    %v961 = vunpack.c.l.b16 %v284
    %v962 = vunpack.c.h.b16 %v284
    %v963 = vunpack.c.l.b16 %v285
    %v964 = vunpack.c.h.b16 %v285
    %v965 = vpack.c.b16 %v541, %v533
    %v966 = vpack.c.b16 %v542, %v534
    %v967 = vpack.c.b16 %v543, %v535
    %v968 = vpack.c.b16 %v544, %v536
    %v969 = vpack.c.b16 %v545, %v537
    %v970 = vpack.c.b16 %v546, %v538
    %v971 = vpack.c.b16 %v547, %v539
    %v972 = vpack.c.b16 %v548, %v540
    %v973 = vpack.c.b16 %v557, %v549
    %v974 = vpack.c.b16 %v558, %v550
    %v975 = vpack.c.b16 %v559, %v551
    %v976 = vpack.c.b16 %v560, %v552
    %v977 = vpack.c.b16 %v561, %v553
    %v978 = vpack.c.b16 %v562, %v554
    %v979 = vpack.c.b16 %v563, %v555
    %v980 = vpack.c.b16 %v564, %v556
    %v981 = vpack.c.b16 %v573, %v565
    %v982 = vpack.c.b16 %v574, %v566
    %v983 = vpack.c.b16 %v575, %v567
    %v984 = vpack.c.b16 %v576, %v568
    %v985 = vpack.c.b16 %v577, %v569
    %v986 = vpack.c.b16 %v578, %v570
    %v987 = vpack.c.b16 %v579, %v571
    %v988 = vpack.c.b16 %v580, %v572
    %v989 = vpack.c.b16 %v589, %v581
    %v990 = vpack.c.b16 %v590, %v582
    %v991 = vpack.c.b16 %v591, %v583
    %v992 = vpack.c.b16 %v592, %v584
    %v993 = vpack.c.b16 %v593, %v585
    %v994 = vpack.c.b16 %v594, %v586
    %v995 = vpack.c.b16 %v595, %v587
    %v996 = vpack.c.b16 %v596, %v588
    %v997 = vpack.c.b16 %v605, %v597
    %v998 = vpack.c.b16 %v606, %v598
    %v999 = vpack.c.b16 %v607, %v599
    %v1000 = vpack.c.b16 %v608, %v600
    %v1001 = vpack.c.b16 %v609, %v601
    %v1002 = vpack.c.b16 %v610, %v602
    %v1003 = vpack.c.b16 %v611, %v603
    %v1004 = vpack.c.b16 %v612, %v604
    %v1005 = vpack.c.b16 %v621, %v613
    %v1006 = vpack.c.b16 %v622, %v614
    %v1007 = vpack.c.b16 %v623, %v615
    %v1008 = vpack.c.b16 %v624, %v616
    %v1009 = vpack.c.b16 %v625, %v617
    %v1010 = vpack.c.b16 %v626, %v618
    %v1011 = vpack.c.b16 %v627, %v619
    %v1012 = vpack.c.b16 %v628, %v620
    %v1013 = vpack.c.b16 %v637, %v629
    %v1014 = vpack.c.b16 %v638, %v630
    %v1015 = vpack.c.b16 %v639, %v631
    %v1016 = vpack.c.b16 %v640, %v632
    %v1017 = vpack.c.b16 %v641, %v633
    %v1018 = vpack.c.b16 %v642, %v634
    %v1019 = vpack.c.b16 %v643, %v635
    %v1020 = vpack.c.b16 %v644, %v636
    %v1021 = vpack.c.b16 %v653, %v645
    %v1022 = vpack.c.b16 %v654, %v646
    %v1023 = vpack.c.b16 %v655, %v647
    %v1024 = vpack.c.b16 %v656, %v648
    %v1025 = vpack.c.b16 %v657, %v649
    %v1026 = vpack.c.b16 %v658, %v650
    %v1027 = vpack.c.b16 %v659, %v651
    %v1028 = vpack.c.b16 %v660, %v652
    %v1029 = vpack.c.b16 %v669, %v661
    %v1030 = vpack.c.b16 %v670, %v662
    %v1031 = vpack.c.b16 %v671, %v663
    %v1032 = vpack.c.b16 %v672, %v664
    %v1033 = vpack.c.b16 %v673, %v665
    %v1034 = vpack.c.b16 %v674, %v666
    %v1035 = vpack.c.b16 %v675, %v667
    %v1036 = vpack.c.b16 %v676, %v668
    %v1037 = vpack.c.b16 %v685, %v677
    %v1038 = vpack.c.b16 %v686, %v678
    %v1039 = vpack.c.b16 %v687, %v679
    %v1040 = vpack.c.b16 %v688, %v680
    %v1041 = vpack.c.b16 %v689, %v681
    %v1042 = vpack.c.b16 %v690, %v682
    %v1043 = vpack.c.b16 %v691, %v683
    %v1044 = vpack.c.b16 %v692, %v684
    %v1045 = vpack.c.b16 %v701, %v693
    %v1046 = vpack.c.b16 %v702, %v694
    %v1047 = vpack.c.b16 %v703, %v695
    %v1048 = vpack.c.b16 %v704, %v696
    %v1049 = vpack.c.b16 %v705, %v697
    %v1050 = vpack.c.b16 %v706, %v698
    %v1051 = vpack.c.b16 %v707, %v699
    %v1052 = vpack.c.b16 %v708, %v700
    %v1053 = vpack.c.b16 %v717, %v709
    %v1054 = vpack.c.b16 %v718, %v710
    %v1055 = vpack.c.b16 %v719, %v711
    %v1056 = vpack.c.b16 %v720, %v712
    %v1057 = vpack.c.b16 %v721, %v713
    %v1058 = vpack.c.b16 %v722, %v714
    %v1059 = vpack.c.b16 %v723, %v715
    %v1060 = vpack.c.b16 %v724, %v716
    %v1061 = vpack.c.b16 %v733, %v725
    %v1062 = vpack.c.b16 %v734, %v726
    %v1063 = vpack.c.b16 %v735, %v727
    %v1064 = vpack.c.b16 %v736, %v728
    %v1065 = vpack.c.b16 %v737, %v729
    %v1066 = vpack.c.b16 %v738, %v730
    %v1067 = vpack.c.b16 %v739, %v731
    %v1068 = vpack.c.b16 %v740, %v732
    %v1069 = vpack.c.b16 %v749, %v741
    %v1070 = vpack.c.b16 %v750, %v742
    %v1071 = vpack.c.b16 %v751, %v743
    %v1072 = vpack.c.b16 %v752, %v744
    %v1073 = vpack.c.b16 %v753, %v745
    %v1074 = vpack.c.b16 %v754, %v746
    %v1075 = vpack.c.b16 %v755, %v747
    %v1076 = vpack.c.b16 %v756, %v748
    %v1077 = vpack.c.b16 %v765, %v757
    %v1078 = vpack.c.b16 %v766, %v758
    %v1079 = vpack.c.b16 %v767, %v759
    %v1080 = vpack.c.b16 %v768, %v760
    %v1081 = vpack.c.b16 %v769, %v761
    %v1082 = vpack.c.b16 %v770, %v762
    %v1083 = vpack.c.b16 %v771, %v763
    %v1084 = vpack.c.b16 %v772, %v764
    %v1085 = vpack.c.b16 %v781, %v773
    %v1086 = vpack.c.b16 %v782, %v774
    %v1087 = vpack.c.b16 %v783, %v775
    %v1088 = vpack.c.b16 %v784, %v776
    %v1089 = vpack.c.b16 %v785, %v777
    %v1090 = vpack.c.b16 %v786, %v778
    %v1091 = vpack.c.b16 %v787, %v779
    %v1092 = vpack.c.b16 %v788, %v780
    %v1093 = vpack.c.b16 %v797, %v789
    %v1094 = vpack.c.b16 %v798, %v790
    %v1095 = vpack.c.b16 %v799, %v791
    %v1096 = vpack.c.b16 %v800, %v792
    %v1097 = vpack.c.b16 %v801, %v793
    %v1098 = vpack.c.b16 %v802, %v794
    %v1099 = vpack.c.b16 %v803, %v795
    %v1100 = vpack.c.b16 %v804, %v796
    %v1101 = vpack.c.b16 %v813, %v805
    %v1102 = vpack.c.b16 %v814, %v806
    %v1103 = vpack.c.b16 %v815, %v807
    %v1104 = vpack.c.b16 %v816, %v808
    %v1105 = vpack.c.b16 %v817, %v809
    %v1106 = vpack.c.b16 %v818, %v810
    %v1107 = vpack.c.b16 %v819, %v811
    %v1108 = vpack.c.b16 %v820, %v812
    %v1109 = vpack.c.b16 %v829, %v821
    %v1110 = vpack.c.b16 %v830, %v822
    %v1111 = vpack.c.b16 %v831, %v823
    %v1112 = vpack.c.b16 %v832, %v824
    %v1113 = vpack.c.b16 %v833, %v825
    %v1114 = vpack.c.b16 %v834, %v826
    %v1115 = vpack.c.b16 %v835, %v827
    %v1116 = vpack.c.b16 %v836, %v828
    %v1117 = vpack.c.b16 %v845, %v837
    %v1118 = vpack.c.b16 %v846, %v838
    %v1119 = vpack.c.b16 %v847, %v839
    %v1120 = vpack.c.b16 %v848, %v840
    %v1121 = vpack.c.b16 %v849, %v841
    %v1122 = vpack.c.b16 %v850, %v842
    %v1123 = vpack.c.b16 %v851, %v843
    %v1124 = vpack.c.b16 %v852, %v844
    %v1125 = vpack.c.b16 %v861, %v853
    %v1126 = vpack.c.b16 %v862, %v854
    %v1127 = vpack.c.b16 %v863, %v855
    %v1128 = vpack.c.b16 %v864, %v856
    %v1129 = vpack.c.b16 %v865, %v857
    %v1130 = vpack.c.b16 %v866, %v858
    %v1131 = vpack.c.b16 %v867, %v859
    %v1132 = vpack.c.b16 %v868, %v860
    %v1133 = vpack.c.b16 %v877, %v869
    %v1134 = vpack.c.b16 %v878, %v870
    %v1135 = vpack.c.b16 %v879, %v871
    %v1136 = vpack.c.b16 %v880, %v872
    %v1137 = vpack.c.b16 %v881, %v873
    %v1138 = vpack.c.b16 %v882, %v874
    %v1139 = vpack.c.b16 %v883, %v875
    %v1140 = vpack.c.b16 %v884, %v876
    %v1141 = vpack.c.b16 %v893, %v885
    %v1142 = vpack.c.b16 %v894, %v886
    %v1143 = vpack.c.b16 %v895, %v887
    %v1144 = vpack.c.b16 %v896, %v888
    %v1145 = vpack.c.b16 %v897, %v889
    %v1146 = vpack.c.b16 %v898, %v890
    %v1147 = vpack.c.b16 %v899, %v891
    %v1148 = vpack.c.b16 %v900, %v892
    %v1149 = vpack.c.b16 %v909, %v901
    %v1150 = vpack.c.b16 %v910, %v902
    %v1151 = vpack.c.b16 %v911, %v903
    %v1152 = vpack.c.b16 %v912, %v904
    %v1153 = vpack.c.b16 %v913, %v905
    %v1154 = vpack.c.b16 %v914, %v906
    %v1155 = vpack.c.b16 %v915, %v907
    %v1156 = vpack.c.b16 %v916, %v908
    %v1157 = vpack.c.b16 %v925, %v917
    %v1158 = vpack.c.b16 %v926, %v918
    %v1159 = vpack.c.b16 %v927, %v919
    %v1160 = vpack.c.b16 %v928, %v920
    %v1161 = vpack.c.b16 %v929, %v921
    %v1162 = vpack.c.b16 %v930, %v922
    %v1163 = vpack.c.b16 %v931, %v923
    %v1164 = vpack.c.b16 %v932, %v924
    %v1165 = vpack.c.b16 %v941, %v933
    %v1166 = vpack.c.b16 %v942, %v934
    %v1167 = vpack.c.b16 %v943, %v935
    %v1168 = vpack.c.b16 %v944, %v936
    %v1169 = vpack.c.b16 %v945, %v937
    %v1170 = vpack.c.b16 %v946, %v938
    %v1171 = vpack.c.b16 %v947, %v939
    %v1172 = vpack.c.b16 %v948, %v940
    %v1173 = vpack.c.b16 %v957, %v949
    %v1174 = vpack.c.b16 %v958, %v950
    %v1175 = vpack.c.b16 %v959, %v951
    %v1176 = vpack.c.b16 %v960, %v952
    %v1177 = vpack.c.b16 %v961, %v953
    %v1178 = vpack.c.b16 %v962, %v954
    %v1179 = vpack.c.b16 %v963, %v955
    %v1180 = vpack.c.b16 %v964, %v956
    %vm1397 = vcmask 392192
    %v1399 = vsel %vm1397, %v313, 0
    %1401 = vmatpush.bf16.msra.mxu0 %v1021
    %1402 = vmatpush.bf16.msra.mxu0 %v1013
    %1403 = vmatpush.bf16.msra.mxu0 %v1005
    %1404 = vmatpush.bf16.msra.mxu0 %v997
    %1405 = vmatpush.bf16.msra.mxu0 %v989
    %1406 = vmatpush.bf16.msra.mxu0 %v981
    %1407 = vmatpush.bf16.msra.mxu0 %v973
    %1408 = vmatpush.bf16.msra.mxu0 %v965
    %1409 = vmatmul.bf16.gmra.mxu0 %v310
    %v1410 = vpop.f32.mrf.mxu0
    %v1411 = vadd.f32 %v288, %v1410
    %v1412 = vpop.f32.mrf.mxu0
    %1413 = vdwg.mxu0
    %1414 = vmatpush.bf16.msra.mxu0 %v1085
    %1415 = vmatpush.bf16.msra.mxu0 %v1077
    %1416 = vmatpush.bf16.msra.mxu0 %v1069
    %1417 = vmatpush.bf16.msra.mxu0 %v1061
    %1418 = vmatpush.bf16.msra.mxu0 %v1053
    %1419 = vmatpush.bf16.msra.mxu0 %v1045
    %1420 = vmatpush.bf16.msra.mxu0 %v1037
    %1421 = vmatpush.bf16.msra.mxu0 %v1029
    %1422 = vmatmul.bf16.gmra.mxu0 %v311
    %v1423 = vpop.f32.mrf.mxu0
    %v1424 = vadd.f32 %v1411, %v1423
    %v1425 = vpop.f32.mrf.mxu0
    %1426 = vdwg.mxu0
    %1427 = vmatpush.bf16.msra.mxu0 %v1149
    %1428 = vmatpush.bf16.msra.mxu0 %v1141
    %1429 = vmatpush.bf16.msra.mxu0 %v1133
    %1430 = vmatpush.bf16.msra.mxu0 %v1125
    %1431 = vmatpush.bf16.msra.mxu0 %v1117
    %1432 = vmatpush.bf16.msra.mxu0 %v1109
    %1433 = vmatpush.bf16.msra.mxu0 %v1101
    %1434 = vmatpush.bf16.msra.mxu0 %v1093
    %1435 = vmatmul.bf16.gmra.mxu0 %v312
    %v1436 = vpop.f32.mrf.mxu0
    %v1437 = vadd.f32 %v1424, %v1436
    %v1438 = vpop.f32.mrf.mxu0
    %1439 = vdwg.mxu0
    %1440 = vmatpush.bf16.msra.mxu0 0
    %1441 = vmatpush.bf16.msra.mxu0 0
    %1442 = vmatpush.bf16.msra.mxu0 0
    %1443 = vmatpush.bf16.msra.mxu0 0
    %1444 = vmatpush.bf16.msra.mxu0 0
    %1445 = vmatpush.bf16.msra.mxu0 %v1173
    %1446 = vmatpush.bf16.msra.mxu0 %v1165
    %1447 = vmatpush.bf16.msra.mxu0 %v1157
    %1448 = vmatmul.bf16.gmra.mxu0 %v1399
    %v1449 = vpop.f32.mrf.mxu0
    %v1450 = vadd.f32 %v1437, %v1449
    %v1451 = vpop.f32.mrf.mxu0
    %1452 = vdwg.mxu0
    %1453 = vmatpush.bf16.msra.mxu0 %v1022
    %1454 = vmatpush.bf16.msra.mxu0 %v1014
    %1455 = vmatpush.bf16.msra.mxu0 %v1006
    %1456 = vmatpush.bf16.msra.mxu0 %v998
    %1457 = vmatpush.bf16.msra.mxu0 %v990
    %1458 = vmatpush.bf16.msra.mxu0 %v982
    %1459 = vmatpush.bf16.msra.mxu0 %v974
    %1460 = vmatpush.bf16.msra.mxu0 %v966
    %1461 = vmatmul.bf16.gmra.mxu0 %v310
    %v1462 = vpop.f32.mrf.mxu0
    %v1463 = vadd.f32 %v289, %v1462
    %v1464 = vpop.f32.mrf.mxu0
    %1465 = vdwg.mxu0
    %1466 = vmatpush.bf16.msra.mxu0 %v1086
    %1467 = vmatpush.bf16.msra.mxu0 %v1078
    %1468 = vmatpush.bf16.msra.mxu0 %v1070
    %1469 = vmatpush.bf16.msra.mxu0 %v1062
    %1470 = vmatpush.bf16.msra.mxu0 %v1054
    %1471 = vmatpush.bf16.msra.mxu0 %v1046
    %1472 = vmatpush.bf16.msra.mxu0 %v1038
    %1473 = vmatpush.bf16.msra.mxu0 %v1030
    %1474 = vmatmul.bf16.gmra.mxu0 %v311
    %v1475 = vpop.f32.mrf.mxu0
    %v1476 = vadd.f32 %v1463, %v1475
    %v1477 = vpop.f32.mrf.mxu0
    %1478 = vdwg.mxu0
    %1479 = vmatpush.bf16.msra.mxu0 %v1150
    %1480 = vmatpush.bf16.msra.mxu0 %v1142
    %1481 = vmatpush.bf16.msra.mxu0 %v1134
    %1482 = vmatpush.bf16.msra.mxu0 %v1126
    %1483 = vmatpush.bf16.msra.mxu0 %v1118
    %1484 = vmatpush.bf16.msra.mxu0 %v1110
    %1485 = vmatpush.bf16.msra.mxu0 %v1102
    %1486 = vmatpush.bf16.msra.mxu0 %v1094
    %1487 = vmatmul.bf16.gmra.mxu0 %v312
    %v1488 = vpop.f32.mrf.mxu0
    %v1489 = vadd.f32 %v1476, %v1488
    %v1490 = vpop.f32.mrf.mxu0
    %1491 = vdwg.mxu0
    %1492 = vmatpush.bf16.msra.mxu0 0
    %1493 = vmatpush.bf16.msra.mxu0 0
    %1494 = vmatpush.bf16.msra.mxu0 0
    %1495 = vmatpush.bf16.msra.mxu0 0
    %1496 = vmatpush.bf16.msra.mxu0 0
    %1497 = vmatpush.bf16.msra.mxu0 %v1174
    %1498 = vmatpush.bf16.msra.mxu0 %v1166
    %1499 = vmatpush.bf16.msra.mxu0 %v1158
    %1500 = vmatmul.bf16.gmra.mxu0 %v1399
    %v1501 = vpop.f32.mrf.mxu0
    %v1502 = vadd.f32 %v1489, %v1501
    %v1503 = vpop.f32.mrf.mxu0
    %1504 = vdwg.mxu0
    %1505 = vmatpush.bf16.msra.mxu0 %v1023
    %1506 = vmatpush.bf16.msra.mxu0 %v1015
    %1507 = vmatpush.bf16.msra.mxu0 %v1007
    %1508 = vmatpush.bf16.msra.mxu0 %v999
    %1509 = vmatpush.bf16.msra.mxu0 %v991
    %1510 = vmatpush.bf16.msra.mxu0 %v983
    %1511 = vmatpush.bf16.msra.mxu0 %v975
    %1512 = vmatpush.bf16.msra.mxu0 %v967
    %1513 = vmatmul.bf16.gmra.mxu0 %v310
    %v1514 = vpop.f32.mrf.mxu0
    %v1515 = vadd.f32 %v290, %v1514
    %v1516 = vpop.f32.mrf.mxu0
    %1517 = vdwg.mxu0
    %1518 = vmatpush.bf16.msra.mxu0 %v1087
    %1519 = vmatpush.bf16.msra.mxu0 %v1079
    %1520 = vmatpush.bf16.msra.mxu0 %v1071
    %1521 = vmatpush.bf16.msra.mxu0 %v1063
    %1522 = vmatpush.bf16.msra.mxu0 %v1055
    %1523 = vmatpush.bf16.msra.mxu0 %v1047
    %1524 = vmatpush.bf16.msra.mxu0 %v1039
    %1525 = vmatpush.bf16.msra.mxu0 %v1031
    %1526 = vmatmul.bf16.gmra.mxu0 %v311
    %v1527 = vpop.f32.mrf.mxu0
    %v1528 = vadd.f32 %v1515, %v1527
    %v1529 = vpop.f32.mrf.mxu0
    %1530 = vdwg.mxu0
    %1531 = vmatpush.bf16.msra.mxu0 %v1151
    %1532 = vmatpush.bf16.msra.mxu0 %v1143
    %1533 = vmatpush.bf16.msra.mxu0 %v1135
    %1534 = vmatpush.bf16.msra.mxu0 %v1127
    %1535 = vmatpush.bf16.msra.mxu0 %v1119
    %1536 = vmatpush.bf16.msra.mxu0 %v1111
    %1537 = vmatpush.bf16.msra.mxu0 %v1103
    %1538 = vmatpush.bf16.msra.mxu0 %v1095
    %1539 = vmatmul.bf16.gmra.mxu0 %v312
    %v1540 = vpop.f32.mrf.mxu0
    %v1541 = vadd.f32 %v1528, %v1540
    %v1542 = vpop.f32.mrf.mxu0
    %1543 = vdwg.mxu0
    %1544 = vmatpush.bf16.msra.mxu0 0
    %1545 = vmatpush.bf16.msra.mxu0 0
    %1546 = vmatpush.bf16.msra.mxu0 0
    %1547 = vmatpush.bf16.msra.mxu0 0
    %1548 = vmatpush.bf16.msra.mxu0 0
    %1549 = vmatpush.bf16.msra.mxu0 %v1175
    %1550 = vmatpush.bf16.msra.mxu0 %v1167
    %1551 = vmatpush.bf16.msra.mxu0 %v1159
    %1552 = vmatmul.bf16.gmra.mxu0 %v1399
    %v1553 = vpop.f32.mrf.mxu0
    %v1554 = vadd.f32 %v1541, %v1553
    %v1555 = vpop.f32.mrf.mxu0
    %1556 = vdwg.mxu0
    %1557 = vmatpush.bf16.msra.mxu0 %v1024
    %1558 = vmatpush.bf16.msra.mxu0 %v1016
    %1559 = vmatpush.bf16.msra.mxu0 %v1008
    %1560 = vmatpush.bf16.msra.mxu0 %v1000
    %1561 = vmatpush.bf16.msra.mxu0 %v992
    %1562 = vmatpush.bf16.msra.mxu0 %v984
    %1563 = vmatpush.bf16.msra.mxu0 %v976
    %1564 = vmatpush.bf16.msra.mxu0 %v968
    %1565 = vmatmul.bf16.gmra.mxu0 %v310
    %v1566 = vpop.f32.mrf.mxu0
    %v1567 = vadd.f32 %v291, %v1566
    %v1568 = vpop.f32.mrf.mxu0
    %1569 = vdwg.mxu0
    %1570 = vmatpush.bf16.msra.mxu0 %v1088
    %1571 = vmatpush.bf16.msra.mxu0 %v1080
    %1572 = vmatpush.bf16.msra.mxu0 %v1072
    %1573 = vmatpush.bf16.msra.mxu0 %v1064
    %1574 = vmatpush.bf16.msra.mxu0 %v1056
    %1575 = vmatpush.bf16.msra.mxu0 %v1048
    %1576 = vmatpush.bf16.msra.mxu0 %v1040
    %1577 = vmatpush.bf16.msra.mxu0 %v1032
    %1578 = vmatmul.bf16.gmra.mxu0 %v311
    %v1579 = vpop.f32.mrf.mxu0
    %v1580 = vadd.f32 %v1567, %v1579
    %v1581 = vpop.f32.mrf.mxu0
    %1582 = vdwg.mxu0
    %1583 = vmatpush.bf16.msra.mxu0 %v1152
    %1584 = vmatpush.bf16.msra.mxu0 %v1144
    %1585 = vmatpush.bf16.msra.mxu0 %v1136
    %1586 = vmatpush.bf16.msra.mxu0 %v1128
    %1587 = vmatpush.bf16.msra.mxu0 %v1120
    %1588 = vmatpush.bf16.msra.mxu0 %v1112
    %1589 = vmatpush.bf16.msra.mxu0 %v1104
    %1590 = vmatpush.bf16.msra.mxu0 %v1096
    %1591 = vmatmul.bf16.gmra.mxu0 %v312
    %v1592 = vpop.f32.mrf.mxu0
    %v1593 = vadd.f32 %v1580, %v1592
    %v1594 = vpop.f32.mrf.mxu0
    %1595 = vdwg.mxu0
    %1596 = vmatpush.bf16.msra.mxu0 0
    %1597 = vmatpush.bf16.msra.mxu0 0
    %1598 = vmatpush.bf16.msra.mxu0 0
    %1599 = vmatpush.bf16.msra.mxu0 0
    %1600 = vmatpush.bf16.msra.mxu0 0
    %1601 = vmatpush.bf16.msra.mxu0 %v1176
    %1602 = vmatpush.bf16.msra.mxu0 %v1168
    %1603 = vmatpush.bf16.msra.mxu0 %v1160
    %1604 = vmatmul.bf16.gmra.mxu0 %v1399
    %v1605 = vpop.f32.mrf.mxu0
    %v1606 = vadd.f32 %v1593, %v1605
    %v1607 = vpop.f32.mrf.mxu0
    %1608 = vdwg.mxu0
    %1609 = vmatpush.bf16.msra.mxu0 %v1025
    %1610 = vmatpush.bf16.msra.mxu0 %v1017
    %1611 = vmatpush.bf16.msra.mxu0 %v1009
    %1612 = vmatpush.bf16.msra.mxu0 %v1001
    %1613 = vmatpush.bf16.msra.mxu0 %v993
    %1614 = vmatpush.bf16.msra.mxu0 %v985
    %1615 = vmatpush.bf16.msra.mxu0 %v977
    %1616 = vmatpush.bf16.msra.mxu0 %v969
    %1617 = vmatmul.bf16.gmra.mxu0 %v310
    %v1618 = vpop.f32.mrf.mxu0
    %v1619 = vadd.f32 %v292, %v1618
    %v1620 = vpop.f32.mrf.mxu0
    %1621 = vdwg.mxu0
    %1622 = vmatpush.bf16.msra.mxu0 %v1089
    %1623 = vmatpush.bf16.msra.mxu0 %v1081
    %1624 = vmatpush.bf16.msra.mxu0 %v1073
    %1625 = vmatpush.bf16.msra.mxu0 %v1065
    %1626 = vmatpush.bf16.msra.mxu0 %v1057
    %1627 = vmatpush.bf16.msra.mxu0 %v1049
    %1628 = vmatpush.bf16.msra.mxu0 %v1041
    %1629 = vmatpush.bf16.msra.mxu0 %v1033
    %1630 = vmatmul.bf16.gmra.mxu0 %v311
    %v1631 = vpop.f32.mrf.mxu0
    %v1632 = vadd.f32 %v1619, %v1631
    %v1633 = vpop.f32.mrf.mxu0
    %1634 = vdwg.mxu0
    %1635 = vmatpush.bf16.msra.mxu0 %v1153
    %1636 = vmatpush.bf16.msra.mxu0 %v1145
    %1637 = vmatpush.bf16.msra.mxu0 %v1137
    %1638 = vmatpush.bf16.msra.mxu0 %v1129
    %1639 = vmatpush.bf16.msra.mxu0 %v1121
    %1640 = vmatpush.bf16.msra.mxu0 %v1113
    %1641 = vmatpush.bf16.msra.mxu0 %v1105
    %1642 = vmatpush.bf16.msra.mxu0 %v1097
    %1643 = vmatmul.bf16.gmra.mxu0 %v312
    %v1644 = vpop.f32.mrf.mxu0
    %v1645 = vadd.f32 %v1632, %v1644
    %v1646 = vpop.f32.mrf.mxu0
    %1647 = vdwg.mxu0
    %1648 = vmatpush.bf16.msra.mxu0 0
    %1649 = vmatpush.bf16.msra.mxu0 0
    %1650 = vmatpush.bf16.msra.mxu0 0
    %1651 = vmatpush.bf16.msra.mxu0 0
    %1652 = vmatpush.bf16.msra.mxu0 0
    %1653 = vmatpush.bf16.msra.mxu0 %v1177
    %1654 = vmatpush.bf16.msra.mxu0 %v1169
    %1655 = vmatpush.bf16.msra.mxu0 %v1161
    %1656 = vmatmul.bf16.gmra.mxu0 %v1399
    %v1657 = vpop.f32.mrf.mxu0
    %v1658 = vadd.f32 %v1645, %v1657
    %v1659 = vpop.f32.mrf.mxu0
    %1660 = vdwg.mxu0
    %1661 = vmatpush.bf16.msra.mxu0 %v1026
    %1662 = vmatpush.bf16.msra.mxu0 %v1018
    %1663 = vmatpush.bf16.msra.mxu0 %v1010
    %1664 = vmatpush.bf16.msra.mxu0 %v1002
    %1665 = vmatpush.bf16.msra.mxu0 %v994
    %1666 = vmatpush.bf16.msra.mxu0 %v986
    %1667 = vmatpush.bf16.msra.mxu0 %v978
    %1668 = vmatpush.bf16.msra.mxu0 %v970
    %1669 = vmatmul.bf16.gmra.mxu0 %v310
    %v1670 = vpop.f32.mrf.mxu0
    %v1671 = vadd.f32 %v293, %v1670
    %v1672 = vpop.f32.mrf.mxu0
    %1673 = vdwg.mxu0
    %1674 = vmatpush.bf16.msra.mxu0 %v1090
    %1675 = vmatpush.bf16.msra.mxu0 %v1082
    %1676 = vmatpush.bf16.msra.mxu0 %v1074
    %1677 = vmatpush.bf16.msra.mxu0 %v1066
    %1678 = vmatpush.bf16.msra.mxu0 %v1058
    %1679 = vmatpush.bf16.msra.mxu0 %v1050
    %1680 = vmatpush.bf16.msra.mxu0 %v1042
    %1681 = vmatpush.bf16.msra.mxu0 %v1034
    %1682 = vmatmul.bf16.gmra.mxu0 %v311
    %v1683 = vpop.f32.mrf.mxu0
    %v1684 = vadd.f32 %v1671, %v1683
    %v1685 = vpop.f32.mrf.mxu0
    %1686 = vdwg.mxu0
    %1687 = vmatpush.bf16.msra.mxu0 %v1154
    %1688 = vmatpush.bf16.msra.mxu0 %v1146
    %1689 = vmatpush.bf16.msra.mxu0 %v1138
    %1690 = vmatpush.bf16.msra.mxu0 %v1130
    %1691 = vmatpush.bf16.msra.mxu0 %v1122
    %1692 = vmatpush.bf16.msra.mxu0 %v1114
    %1693 = vmatpush.bf16.msra.mxu0 %v1106
    %1694 = vmatpush.bf16.msra.mxu0 %v1098
    %1695 = vmatmul.bf16.gmra.mxu0 %v312
    %v1696 = vpop.f32.mrf.mxu0
    %v1697 = vadd.f32 %v1684, %v1696
    %v1698 = vpop.f32.mrf.mxu0
    %1699 = vdwg.mxu0
    %1700 = vmatpush.bf16.msra.mxu0 0
    %1701 = vmatpush.bf16.msra.mxu0 0
    %1702 = vmatpush.bf16.msra.mxu0 0
    %1703 = vmatpush.bf16.msra.mxu0 0
    %1704 = vmatpush.bf16.msra.mxu0 0
    %1705 = vmatpush.bf16.msra.mxu0 %v1178
    %1706 = vmatpush.bf16.msra.mxu0 %v1170
    %1707 = vmatpush.bf16.msra.mxu0 %v1162
    %1708 = vmatmul.bf16.gmra.mxu0 %v1399
    %v1709 = vpop.f32.mrf.mxu0
    %v1710 = vadd.f32 %v1697, %v1709
    %v1711 = vpop.f32.mrf.mxu0
    %1712 = vdwg.mxu0
    %1713 = vmatpush.bf16.msra.mxu0 %v1027
    %1714 = vmatpush.bf16.msra.mxu0 %v1019
    %1715 = vmatpush.bf16.msra.mxu0 %v1011
    %1716 = vmatpush.bf16.msra.mxu0 %v1003
    %1717 = vmatpush.bf16.msra.mxu0 %v995
    %1718 = vmatpush.bf16.msra.mxu0 %v987
    %1719 = vmatpush.bf16.msra.mxu0 %v979
    %1720 = vmatpush.bf16.msra.mxu0 %v971
    %1721 = vmatmul.bf16.gmra.mxu0 %v310
    %v1722 = vpop.f32.mrf.mxu0
    %v1723 = vadd.f32 %v294, %v1722
    %v1724 = vpop.f32.mrf.mxu0
    %1725 = vdwg.mxu0
    %1726 = vmatpush.bf16.msra.mxu0 %v1091
    %1727 = vmatpush.bf16.msra.mxu0 %v1083
    %1728 = vmatpush.bf16.msra.mxu0 %v1075
    %1729 = vmatpush.bf16.msra.mxu0 %v1067
    %1730 = vmatpush.bf16.msra.mxu0 %v1059
    %1731 = vmatpush.bf16.msra.mxu0 %v1051
    %1732 = vmatpush.bf16.msra.mxu0 %v1043
    %1733 = vmatpush.bf16.msra.mxu0 %v1035
    %1734 = vmatmul.bf16.gmra.mxu0 %v311
    %v1735 = vpop.f32.mrf.mxu0
    %v1736 = vadd.f32 %v1723, %v1735
    %v1737 = vpop.f32.mrf.mxu0
    %1738 = vdwg.mxu0
    %1739 = vmatpush.bf16.msra.mxu0 %v1155
    %1740 = vmatpush.bf16.msra.mxu0 %v1147
    %1741 = vmatpush.bf16.msra.mxu0 %v1139
    %1742 = vmatpush.bf16.msra.mxu0 %v1131
    %1743 = vmatpush.bf16.msra.mxu0 %v1123
    %1744 = vmatpush.bf16.msra.mxu0 %v1115
    %1745 = vmatpush.bf16.msra.mxu0 %v1107
    %1746 = vmatpush.bf16.msra.mxu0 %v1099
    %1747 = vmatmul.bf16.gmra.mxu0 %v312
    %v1748 = vpop.f32.mrf.mxu0
    %v1749 = vadd.f32 %v1736, %v1748
    %v1750 = vpop.f32.mrf.mxu0
    %1751 = vdwg.mxu0
    %1752 = vmatpush.bf16.msra.mxu0 0
    %1753 = vmatpush.bf16.msra.mxu0 0
    %1754 = vmatpush.bf16.msra.mxu0 0
    %1755 = vmatpush.bf16.msra.mxu0 0
    %1756 = vmatpush.bf16.msra.mxu0 0
    %1757 = vmatpush.bf16.msra.mxu0 %v1179
    %1758 = vmatpush.bf16.msra.mxu0 %v1171
    %1759 = vmatpush.bf16.msra.mxu0 %v1163
    %1760 = vmatmul.bf16.gmra.mxu0 %v1399
    %v1761 = vpop.f32.mrf.mxu0
    %v1762 = vadd.f32 %v1749, %v1761
    %v1763 = vpop.f32.mrf.mxu0
    %1764 = vdwg.mxu0
    %1765 = vmatpush.bf16.msra.mxu0 %v1028
    %1766 = vmatpush.bf16.msra.mxu0 %v1020
    %1767 = vmatpush.bf16.msra.mxu0 %v1012
    %1768 = vmatpush.bf16.msra.mxu0 %v1004
    %1769 = vmatpush.bf16.msra.mxu0 %v996
    %1770 = vmatpush.bf16.msra.mxu0 %v988
    %1771 = vmatpush.bf16.msra.mxu0 %v980
    %1772 = vmatpush.bf16.msra.mxu0 %v972
    %1773 = vmatmul.bf16.gmra.mxu0 %v310
    %v1774 = vpop.f32.mrf.mxu0
    %v1775 = vadd.f32 %v295, %v1774
    %v1776 = vpop.f32.mrf.mxu0
    %1777 = vdwg.mxu0
    %1778 = vmatpush.bf16.msra.mxu0 %v1092
    %1779 = vmatpush.bf16.msra.mxu0 %v1084
    %1780 = vmatpush.bf16.msra.mxu0 %v1076
    %1781 = vmatpush.bf16.msra.mxu0 %v1068
    %1782 = vmatpush.bf16.msra.mxu0 %v1060
    %1783 = vmatpush.bf16.msra.mxu0 %v1052
    %1784 = vmatpush.bf16.msra.mxu0 %v1044
    %1785 = vmatpush.bf16.msra.mxu0 %v1036
    %1786 = vmatmul.bf16.gmra.mxu0 %v311
    %v1787 = vpop.f32.mrf.mxu0
    %v1788 = vadd.f32 %v1775, %v1787
    %v1789 = vpop.f32.mrf.mxu0
    %1790 = vdwg.mxu0
    %1791 = vmatpush.bf16.msra.mxu0 %v1156
    %1792 = vmatpush.bf16.msra.mxu0 %v1148
    %1793 = vmatpush.bf16.msra.mxu0 %v1140
    %1794 = vmatpush.bf16.msra.mxu0 %v1132
    %1795 = vmatpush.bf16.msra.mxu0 %v1124
    %1796 = vmatpush.bf16.msra.mxu0 %v1116
    %1797 = vmatpush.bf16.msra.mxu0 %v1108
    %1798 = vmatpush.bf16.msra.mxu0 %v1100
    %1799 = vmatmul.bf16.gmra.mxu0 %v312
    %v1800 = vpop.f32.mrf.mxu0
    %v1801 = vadd.f32 %v1788, %v1800
    %v1802 = vpop.f32.mrf.mxu0
    %1803 = vdwg.mxu0
    %1804 = vmatpush.bf16.msra.mxu0 0
    %1805 = vmatpush.bf16.msra.mxu0 0
    %1806 = vmatpush.bf16.msra.mxu0 0
    %1807 = vmatpush.bf16.msra.mxu0 0
    %1808 = vmatpush.bf16.msra.mxu0 0
    %1809 = vmatpush.bf16.msra.mxu0 %v1180
    %1810 = vmatpush.bf16.msra.mxu0 %v1172
    %1811 = vmatpush.bf16.msra.mxu0 %v1164
    %1812 = vmatmul.bf16.gmra.mxu0 %v1399
    %v1813 = vpop.f32.mrf.mxu0
    %v1814 = vadd.f32 %v1801, %v1813
    %v1815 = vpop.f32.mrf.mxu0
    %1816 = vdwg.mxu0
    %vm1817 = vcmp.gt.f32.partialorder %v1450, 0.0
    %vm1818 = vcmp.gt.f32.partialorder %v1502, 0.0
    %vm1819 = vcmp.gt.f32.partialorder %v1554, 0.0
    %vm1820 = vcmp.gt.f32.partialorder %v1606, 0.0
    %vm1821 = vcmp.gt.f32.partialorder %v1658, 0.0
    %vm1822 = vcmp.gt.f32.partialorder %v1710, 0.0
    %vm1823 = vcmp.gt.f32.partialorder %v1762, 0.0
    %vm1824 = vcmp.gt.f32.partialorder %v1814, 0.0
    %v1825 = vstv %s65
    %v1826 = vmul.f32 %v1825, %v1450
    %v1827 = vmul.f32 %v1825, %v1502
    %v1828 = vmul.f32 %v1825, %v1554
    %v1829 = vmul.f32 %v1825, %v1606
    %v1830 = vmul.f32 %v1825, %v1658
    %v1831 = vmul.f32 %v1825, %v1710
    %v1832 = vmul.f32 %v1825, %v1762
    %v1833 = vmul.f32 %v1825, %v1814
    %v1834 = vsel %vm1817, %v1450, %v1826
    %v1835 = vsel %vm1818, %v1502, %v1827
    %v1836 = vsel %vm1819, %v1554, %v1828
    %v1837 = vsel %vm1820, %v1606, %v1829
    %v1838 = vsel %vm1821, %v1658, %v1830
    %v1839 = vsel %vm1822, %v1710, %v1831
    %v1840 = vsel %vm1823, %v1762, %v1832
    %v1841 = vsel %vm1824, %v1814, %v1833
    %v1842 = vmax.f32 %v1834, %v1836
    %v1843 = vmax.f32 %v1835, %v1837
    %v1844 = vmax.f32 %v1838, %v1840
    %v1845 = vmax.f32 %v1839, %v1841
    %v1846 = vmax.f32 %v1842, %v1844
    %v1847 = vmax.f32 %v1843, %v1845
    %v1848 = vpack.c.bf16 %v1846, %v1846
    %v1849 = vpack.c.bf16 %v1847, %v1847
    %v1850 = vld [vmem:[%s4] sm:$0xff]
    %v1851 = vld [vmem:[%s4 + $0x8] sm:$0xff]
    %v1852 = vld [vmem:[%s4 + $0x10] sm:$0xff]
    %v1853 = vld [vmem:[%s4 + $0x18] sm:$0xff]
    %v1854 = vld [vmem:[%s4 + $0x20] sm:$0xff]
    %v1855 = vld [vmem:[%s4 + $0x28] sm:$0xff]
    %v1856 = vld [vmem:[%s4 + $0x30] sm:$0xff]
    %v1857 = vld [vmem:[%s4 + $0x38] sm:$0xff]
    %v1858 = vld [vmem:[%s4 + $0x40] sm:$0xff]
    %v1859 = vld [vmem:[%s4 + $0x48] sm:$0xff]
    %v1860 = vld [vmem:[%s4 + $0x50] sm:$0xff]
    %v1861 = vld [vmem:[%s4 + $0x58] sm:$0xff]
    %v1862 = vld [vmem:[%s4 + $0x60] sm:$0xff]
    %v1863 = vld [vmem:[%s4 + $0x68] sm:$0xff]
    %v1864 = vld [vmem:[%s4 + $0x70] sm:$0xff]
    %v1865 = vld [vmem:[%s4 + $0x78] sm:$0xff]
    %v1866 = vld [vmem:[%s4 + $0x80] sm:$0xff]
    %v1867 = vld [vmem:[%s4 + $0x88] sm:$0xff]
    %v1868 = vld [vmem:[%s4 + $0x90] sm:$0xff]
    %v1869 = vld [vmem:[%s4 + $0x98] sm:$0xff]
    %v1870 = vld [vmem:[%s4 + $0xa0] sm:$0xff]
    %v1871 = vld [vmem:[%s4 + $0xa8] sm:$0xff]
    %v1872 = vld [vmem:[%s4 + $0xb0] sm:$0xff]
    %v1873 = vld [vmem:[%s4 + $0xb8] sm:$0xff]
    %v1874 = vld [vmem:[%s4 + $0xc0] sm:$0xff]
    %v1875 = vld [vmem:[%s4 + $0xc8] sm:$0xff]
    %v1876 = vld [vmem:[%s4 + $0xd0] sm:$0xff]
    %v1877 = vld [vmem:[%s4 + $0xd8] sm:$0xff]
    %v1878 = vld [vmem:[%s4 + $0xe0] sm:$0xff]
    %v1879 = vld [vmem:[%s4 + $0xe8] sm:$0xff]
    %v1880 = vld [vmem:[%s4 + $0xf0] sm:$0xff]
    %v1881 = vld [vmem:[%s4 + $0xf8] sm:$0xff]
    %v1882 = vld [vmem:[%s5] sm:$0x3]
    %v1884 = vperm.slane %v1882, 0
    %v1885 = vperm.slane %v1882, 1
    %v1920 = vunpack.c.l.b16 %v1850
    %v1921 = vunpack.c.h.b16 %v1850
    %v1922 = vunpack.c.l.b16 %v1851
    %v1923 = vunpack.c.h.b16 %v1851
    %v1924 = vunpack.c.l.b16 %v1852
    %v1925 = vunpack.c.h.b16 %v1852
    %v1926 = vunpack.c.l.b16 %v1853
    %v1927 = vunpack.c.h.b16 %v1853
    %v1928 = vunpack.c.l.b16 %v1854
    %v1929 = vunpack.c.h.b16 %v1854
    %v1930 = vunpack.c.l.b16 %v1855
    %v1931 = vunpack.c.h.b16 %v1855
    %v1932 = vunpack.c.l.b16 %v1856
    %v1933 = vunpack.c.h.b16 %v1856
    %v1934 = vunpack.c.l.b16 %v1857
    %v1935 = vunpack.c.h.b16 %v1857
    %v1936 = vunpack.c.l.b16 %v1858
    %v1937 = vunpack.c.h.b16 %v1858
    %v1938 = vunpack.c.l.b16 %v1859
    %v1939 = vunpack.c.h.b16 %v1859
    %v1940 = vunpack.c.l.b16 %v1860
    %v1941 = vunpack.c.h.b16 %v1860
    %v1942 = vunpack.c.l.b16 %v1861
    %v1943 = vunpack.c.h.b16 %v1861
    %v1944 = vunpack.c.l.b16 %v1862
    %v1945 = vunpack.c.h.b16 %v1862
    %v1946 = vunpack.c.l.b16 %v1863
    %v1947 = vunpack.c.h.b16 %v1863
    %v1948 = vunpack.c.l.b16 %v1864
    %v1949 = vunpack.c.h.b16 %v1864
    %v1950 = vunpack.c.l.b16 %v1865
    %v1951 = vunpack.c.h.b16 %v1865
    %v1952 = vunpack.c.l.b16 %v1866
    %v1953 = vunpack.c.h.b16 %v1866
    %v1954 = vunpack.c.l.b16 %v1867
    %v1955 = vunpack.c.h.b16 %v1867
    %v1956 = vunpack.c.l.b16 %v1868
    %v1957 = vunpack.c.h.b16 %v1868
    %v1958 = vunpack.c.l.b16 %v1869
    %v1959 = vunpack.c.h.b16 %v1869
    %v1960 = vunpack.c.l.b16 %v1870
    %v1961 = vunpack.c.h.b16 %v1870
    %v1962 = vunpack.c.l.b16 %v1871
    %v1963 = vunpack.c.h.b16 %v1871
    %v1964 = vunpack.c.l.b16 %v1872
    %v1965 = vunpack.c.h.b16 %v1872
    %v1966 = vunpack.c.l.b16 %v1873
    %v1967 = vunpack.c.h.b16 %v1873
    %v1968 = vunpack.c.l.b16 %v1874
    %v1969 = vunpack.c.h.b16 %v1874
    %v1970 = vunpack.c.l.b16 %v1875
    %v1971 = vunpack.c.h.b16 %v1875
    %v1972 = vunpack.c.l.b16 %v1876
    %v1973 = vunpack.c.h.b16 %v1876
    %v1974 = vunpack.c.l.b16 %v1877
    %v1975 = vunpack.c.h.b16 %v1877
    %v1976 = vunpack.c.l.b16 %v1878
    %v1977 = vunpack.c.h.b16 %v1878
    %v1978 = vunpack.c.l.b16 %v1879
    %v1979 = vunpack.c.h.b16 %v1879
    %v1980 = vunpack.c.l.b16 %v1880
    %v1981 = vunpack.c.h.b16 %v1880
    %v1982 = vunpack.c.l.b16 %v1881
    %v1983 = vunpack.c.h.b16 %v1881
    %v1984 = vpack.c.b16 %v1922, %v1920
    %v1985 = vpack.c.b16 %v1923, %v1921
    %v1986 = vpack.c.b16 %v1926, %v1924
    %v1987 = vpack.c.b16 %v1927, %v1925
    %v1988 = vpack.c.b16 %v1930, %v1928
    %v1989 = vpack.c.b16 %v1931, %v1929
    %v1990 = vpack.c.b16 %v1934, %v1932
    %v1991 = vpack.c.b16 %v1935, %v1933
    %v1992 = vpack.c.b16 %v1938, %v1936
    %v1993 = vpack.c.b16 %v1939, %v1937
    %v1994 = vpack.c.b16 %v1942, %v1940
    %v1995 = vpack.c.b16 %v1943, %v1941
    %v1996 = vpack.c.b16 %v1946, %v1944
    %v1997 = vpack.c.b16 %v1947, %v1945
    %v1998 = vpack.c.b16 %v1950, %v1948
    %v1999 = vpack.c.b16 %v1951, %v1949
    %v2000 = vpack.c.b16 %v1954, %v1952
    %v2001 = vpack.c.b16 %v1955, %v1953
    %v2002 = vpack.c.b16 %v1958, %v1956
    %v2003 = vpack.c.b16 %v1959, %v1957
    %v2004 = vpack.c.b16 %v1962, %v1960
    %v2005 = vpack.c.b16 %v1963, %v1961
    %v2006 = vpack.c.b16 %v1966, %v1964
    %v2007 = vpack.c.b16 %v1967, %v1965
    %v2008 = vpack.c.b16 %v1970, %v1968
    %v2009 = vpack.c.b16 %v1971, %v1969
    %v2010 = vpack.c.b16 %v1974, %v1972
    %v2011 = vpack.c.b16 %v1975, %v1973
    %v2012 = vpack.c.b16 %v1978, %v1976
    %v2013 = vpack.c.b16 %v1979, %v1977
    %v2014 = vpack.c.b16 %v1982, %v1980
    %v2015 = vpack.c.b16 %v1983, %v1981
    %2048 = vmatpush.bf16.msra.mxu0 %v1998
    %2049 = vmatpush.bf16.msra.mxu0 %v1996
    %2050 = vmatpush.bf16.msra.mxu0 %v1994
    %2051 = vmatpush.bf16.msra.mxu0 %v1992
    %2052 = vmatpush.bf16.msra.mxu0 %v1990
    %2053 = vmatpush.bf16.msra.mxu0 %v1988
    %2054 = vmatpush.bf16.msra.mxu0 %v1986
    %2055 = vmatpush.bf16.msra.mxu0 %v1984
    %2056 = vmatmul.bf16.gmra.mxu0 %v1848
    %v2057 = vpop.f32.mrf.mxu0
    %v2058 = vadd.f32 %v1884, %v2057
    %v2059 = vpop.f32.mrf.mxu0
    %2060 = vdwg.mxu0
    %2061 = vmatpush.bf16.msra.mxu0 %v2014
    %2062 = vmatpush.bf16.msra.mxu0 %v2012
    %2063 = vmatpush.bf16.msra.mxu0 %v2010
    %2064 = vmatpush.bf16.msra.mxu0 %v2008
    %2065 = vmatpush.bf16.msra.mxu0 %v2006
    %2066 = vmatpush.bf16.msra.mxu0 %v2004
    %2067 = vmatpush.bf16.msra.mxu0 %v2002
    %2068 = vmatpush.bf16.msra.mxu0 %v2000
    %2069 = vmatmul.bf16.gmra.mxu0 %v1849
    %v2070 = vpop.f32.mrf.mxu0
    %v2071 = vadd.f32 %v2058, %v2070
    %v2072 = vpop.f32.mrf.mxu0
    %2073 = vdwg.mxu0
    %2074 = vmatpush.bf16.msra.mxu0 %v1999
    %2075 = vmatpush.bf16.msra.mxu0 %v1997
    %2076 = vmatpush.bf16.msra.mxu0 %v1995
    %2077 = vmatpush.bf16.msra.mxu0 %v1993
    %2078 = vmatpush.bf16.msra.mxu0 %v1991
    %2079 = vmatpush.bf16.msra.mxu0 %v1989
    %2080 = vmatpush.bf16.msra.mxu0 %v1987
    %2081 = vmatpush.bf16.msra.mxu0 %v1985
    %2082 = vmatmul.bf16.gmra.mxu0 %v1848
    %v2083 = vpop.f32.mrf.mxu0
    %v2084 = vadd.f32 %v1885, %v2083
    %v2085 = vpop.f32.mrf.mxu0
    %2086 = vdwg.mxu0
    %2087 = vmatpush.bf16.msra.mxu0 %v2015
    %2088 = vmatpush.bf16.msra.mxu0 %v2013
    %2089 = vmatpush.bf16.msra.mxu0 %v2011
    %2090 = vmatpush.bf16.msra.mxu0 %v2009
    %2091 = vmatpush.bf16.msra.mxu0 %v2007
    %2092 = vmatpush.bf16.msra.mxu0 %v2005
    %2093 = vmatpush.bf16.msra.mxu0 %v2003
    %2094 = vmatpush.bf16.msra.mxu0 %v2001
    %2095 = vmatmul.bf16.gmra.mxu0 %v1849
    %v2096 = vpop.f32.mrf.mxu0
    %v2097 = vadd.f32 %v2084, %v2096
    %v2098 = vpop.f32.mrf.mxu0
    %2099 = vdwg.mxu0
    %vm2100 = vcmp.gt.f32.partialorder %v2071, 0.0
    %vm2101 = vcmp.gt.f32.partialorder %v2097, 0.0
    %v2102 = vstv %s66
    %v2103 = vmul.f32 %v2102, %v2071
    %v2104 = vmul.f32 %v2102, %v2097
    %v2105 = vsel %vm2100, %v2071, %v2103
    %v2106 = vsel %vm2101, %v2097, %v2104
    %v2107 = vpack.c.bf16 %v2105, %v2105
    %v2108 = vpack.c.bf16 %v2106, %v2106
    %v2109 = vld [vmem:[%s6] sm:$0xf]
    %v2110 = vld [vmem:[%s6 + $0x4] sm:$0xf]
    %v2111 = vld [vmem:[%s6 + $0x8] sm:$0xf]
    %v2112 = vld [vmem:[%s6 + $0xc] sm:$0xf]
    %v2113 = vld [vmem:[%s6 + $0x10] sm:$0xf]
    %v2114 = vld [vmem:[%s6 + $0x14] sm:$0xf]
    %v2115 = vld [vmem:[%s6 + $0x18] sm:$0xf]
    %v2116 = vld [vmem:[%s6 + $0x1c] sm:$0xf]
    %v2117 = vld [vmem:[%s6 + $0x20] sm:$0xf]
    %v2118 = vld [vmem:[%s6 + $0x24] sm:$0xf]
    %v2119 = vld [vmem:[%s6 + $0x28] sm:$0xf]
    %v2120 = vld [vmem:[%s6 + $0x2c] sm:$0xf]
    %v2121 = vld [vmem:[%s6 + $0x30] sm:$0xf]
    %v2122 = vld [vmem:[%s6 + $0x34] sm:$0xf]
    %v2123 = vld [vmem:[%s6 + $0x38] sm:$0xf]
    %v2124 = vld [vmem:[%s6 + $0x3c] sm:$0xf]
    %v2125 = vld [vmem:[%s6 + $0x40] sm:$0xf]
    %v2126 = vld [vmem:[%s6 + $0x44] sm:$0xf]
    %v2127 = vld [vmem:[%s7] sm:$0x1]
    %v2129 = vperm.slane %v2127, 0
    %v2149 = vunpack.c.l.b16 %v2109
    %v2150 = vunpack.c.l.b16 %v2110
    %v2151 = vunpack.c.l.b16 %v2111
    %v2152 = vunpack.c.l.b16 %v2112
    %v2153 = vunpack.c.l.b16 %v2113
    %v2154 = vunpack.c.l.b16 %v2114
    %v2155 = vunpack.c.l.b16 %v2115
    %v2156 = vunpack.c.l.b16 %v2116
    %v2157 = vunpack.c.l.b16 %v2117
    %v2158 = vunpack.c.l.b16 %v2118
    %v2159 = vunpack.c.l.b16 %v2119
    %v2160 = vunpack.c.l.b16 %v2120
    %v2161 = vunpack.c.l.b16 %v2121
    %v2162 = vunpack.c.l.b16 %v2122
    %v2163 = vunpack.c.l.b16 %v2123
    %v2164 = vunpack.c.l.b16 %v2124
    %v2165 = vunpack.c.l.b16 %v2125
    %v2166 = vunpack.c.l.b16 %v2126
    %v2167 = vpack.c.b16 %v2150, %v2149
    %v2168 = vpack.c.b16 %v2152, %v2151
    %v2169 = vpack.c.b16 %v2154, %v2153
    %v2170 = vpack.c.b16 %v2156, %v2155
    %v2171 = vpack.c.b16 %v2158, %v2157
    %v2172 = vpack.c.b16 %v2160, %v2159
    %v2173 = vpack.c.b16 %v2162, %v2161
    %v2174 = vpack.c.b16 %v2164, %v2163
    %v2175 = vpack.c.b16 %v2166, %v2165
    %vm2185 = vcmask 130048
    %v2187 = vsel %vm2185, %v2108, 0
    %2189 = vmatpush.bf16.msra.mxu0 %v2174
    %2190 = vmatpush.bf16.msra.mxu0 %v2173
    %2191 = vmatpush.bf16.msra.mxu0 %v2172
    %2192 = vmatpush.bf16.msra.mxu0 %v2171
    %2193 = vmatpush.bf16.msra.mxu0 %v2170
    %2194 = vmatpush.bf16.msra.mxu0 %v2169
    %2195 = vmatpush.bf16.msra.mxu0 %v2168
    %2196 = vmatpush.bf16.msra.mxu0 %v2167
    %2197 = vmatmul.bf16.gmra.mxu0 %v2107
    %v2198 = vpop.f32.mrf.mxu0
    %v2199 = vadd.f32 %v2129, %v2198
    %v2200 = vpop.f32.mrf.mxu0
    %2201 = vdwg.mxu0
    %2202 = vmatpush.bf16.msra.mxu0 0
    %2203 = vmatpush.bf16.msra.mxu0 0
    %2204 = vmatpush.bf16.msra.mxu0 0
    %2205 = vmatpush.bf16.msra.mxu0 0
    %2206 = vmatpush.bf16.msra.mxu0 0
    %2207 = vmatpush.bf16.msra.mxu0 0
    %2208 = vmatpush.bf16.msra.mxu0 0
    %2209 = vmatpush.bf16.msra.mxu0 %v2175
    %2210 = vmatmul.bf16.gmra.mxu0 %v2187
    %v2211 = vpop.f32.mrf.mxu0
    %v2212 = vadd.f32 %v2199, %v2211
    %v2213 = vpop.f32.mrf.mxu0
    %2214 = vdwg.mxu0
    %vm2215 = vcmp.gt.f32.partialorder %v2212, 0.0
    %v2216 = vstv %s67
    %v2217 = vmul.f32 %v2216, %v2212
    %v2218 = vsel %vm2215, %v2212, %v2217
    %v2219 = vpack.c.bf16 %v2218, %v2218
    %v2220 = vld [vmem:[%s8] sm:$0xf]
    %v2221 = vld [vmem:[%s8 + $0x4] sm:$0xf]
    %v2222 = vld [vmem:[%s8 + $0x8] sm:$0xf]
    %v2223 = vld [vmem:[%s8 + $0xc] sm:$0xf]
    %v2224 = vld [vmem:[%s9] sm:$0x1]
    %v2226 = vperm.slane %v2224, 0
    %v2232 = vunpack.c.l.b16 %v2220
    %v2233 = vunpack.c.l.b16 %v2221
    %v2234 = vunpack.c.l.b16 %v2222
    %v2235 = vunpack.c.l.b16 %v2223
    %v2236 = vpack.c.b16 %v2233, %v2232
    %v2237 = vpack.c.b16 %v2235, %v2234
    %vm2240 = vcmask 261120
    %v2242 = vsel %vm2240, %v2219, 0
    %2244 = vmatpush.bf16.msra.mxu0 0
    %2245 = vmatpush.bf16.msra.mxu0 0
    %2246 = vmatpush.bf16.msra.mxu0 0
    %2247 = vmatpush.bf16.msra.mxu0 0
    %2248 = vmatpush.bf16.msra.mxu0 0
    %2249 = vmatpush.bf16.msra.mxu0 0
    %2250 = vmatpush.bf16.msra.mxu0 %v2237
    %2251 = vmatpush.bf16.msra.mxu0 %v2236
    %2252 = vmatmul.bf16.gmra.mxu0 %v2242
    %v2253 = vpop.f32.mrf.mxu0
    %v2254 = vadd.f32 %v2226, %v2253
    %v2255 = vpop.f32.mrf.mxu0
    %2256 = vdwg.mxu0
    %2258 = vrot.lane.b32.xlu0 %v2254, 1
    %v2259 = vpop.permute.xlu0 %2258
    %v2261 = vsub.f32 %v2254, %v2259
    %v2262 = vsub.f32 0.0, %v2261
    %v2263 = vmul.f32 %v2262, 1.442695
    %v2264 = vpow.pop %v2263
    %v2265 = vadd.f32 %v2264, 1.0
    %v2266 = vrcp.pop %v2265
    %v2267 = vmul.f32 %v2265, %v2266
    %v2268 = vsub.f32 1.0, %v2267
    %v2269 = vmul.f32 %v2266, %v2268
    %v2270 = vadd.f32 %v2266, %v2269
    %vm2271 = vweird.f32 %v2265
    %vm2272 = vweird.f32 %v2266
    %vm2273 = vmor %vm2271, %vm2272
    %v2274 = vsel %vm2273, %v2266, %v2270
    %v2275 = vand.u32 2147483647, %v2265
    %vm2276 = vcmp.eq.f32.partialorder %v2275, 8.507059e+37
    %v2277 = vand.u32 %v2265, 2147483648
    %v2278 = vor.u32 1.1754944e-38, %v2277
    %v2279 = vsel %vm2276, %v2278, %v2274
    %v2280 = vmul.f32 1.0, %v2279
    %v2281 = vsub.f32 1.0, %v2280
    %2283 = vrot.lane.b32.xlu0 %v2281, 127
    %v2284 = vpop.permute.xlu0 %2283
    %vm2286 = vcmask 7168
    %v2287 = vsel %vm2286, %v2284, %v2280
    %vm2288 = vcmask 15360
    %v2289 = vsel %vm2288, %v2287, %v2254
    %vm2290 = vcmask 64512
    %2291 = vst.msk [vmem:[%s10] sm:$0xff] %vm2290, %v2289
    // Predicated region
    $region50: #{pnet_forward.1} parent=1 // pred_check
      _
    $region51: #{pnet_forward.1} parent=1 // pred_check_branch
      %2293 = sbr.rel (0) target = $region53
    $region52: #{pnet_forward.1} parent=1 // pred_region
      _
    $region53: #{pnet_forward.1} parent=1 // pred_fallthru
      _
    // Predicated region
    $region54: #{pnet_forward.1} parent=1 // pred_check
      _
    $region55: #{pnet_forward.1} parent=1 // pred_check_branch
      %2295 = sbr.rel (0) target = $region57
    $region56: #{pnet_forward.1} parent=1 // pred_region
      _
    $region57: #{pnet_forward.1} parent=1 // pred_fallthru
      _
    %2296 = vsyncpa [#allocation3], 1
    %2297 = vsyncpa [#allocation4], 1

</llo_original>
